<compile_context>
chip_gen: v5e
topology: v5e:2x2
jax: 0.10.0
libtpu: 0.0.40
codegen_flags: <defaults>
</compile_context>

<pallas_src>
import jax
import jax.numpy as jnp
from jax.experimental import pallas as pl
from jax.experimental.pallas import tpu as pltpu


# ----------------------------------------------------------------------------
# Whole-block fused kernel: depth x (1x1 conv+ReLU -> 3x3 conv+ReLU -> concat)
# ----------------------------------------------------------------------------
def _make_dense_block_kernel(schedule, H, W):
    """schedule: list of (cin, growth) per layer (static Python ints)."""
    depth = len(schedule)
    HW = H * W
    pad = W + 1                       # halo wide enough for the +/-(W+1) taps

    def kernel(*refs):
        x_ref = refs[0]               # (1, C0, HW)        bf16
        o_ref = refs[1 + 4 * depth]   # (1, C_out, HW)     bf16
        h1p_ref = refs[2 + 4 * depth] # (maxC, HW + 2*pad) f32  scratch
        taps_ref = refs[3 + 4 * depth]# (9*maxC, HW)       f32  scratch

        # Static per-column validity masks for the W edges of the 3x3 stencil.
        w_idx = jax.lax.broadcasted_iota(jnp.int32, (1, HW), 1) % W
        mask_l = w_idx >= 1           # tap reads (w-1): invalid at w == 0
        mask_r = w_idx <= W - 2       # tap reads (w+1): invalid at w == W-1

        # Zero the lane-padded h1 scratch once; the halo columns stay zero for
        # every layer and implement the conv's padding=1 along H.
        h1p_ref[...] = jnp.zeros_like(h1p_ref)

        # Seed the dense-concat output with the input activation.
        c0 = schedule[0][0]
        o_ref[0, 0:c0, :] = x_ref[0]

        for d, (cin, g) in enumerate(schedule):
            w1_ref = refs[1 + 4 * d]  # (cin, cin)  bf16, (out, in)
            b1_ref = refs[2 + 4 * d]  # (cin, 1)    f32
            w3_ref = refs[3 + 4 * d]  # (g, 9*cin)  bf16, K ordered (di, dj, c)
            b3_ref = refs[4 + 4 * d]  # (g, 1)      f32

            act = o_ref[0, 0:cin, :]                       # (cin, HW) bf16

            # ---- 1x1 conv + ReLU: one MXU GEMM, f32 acc, fused f32 epilogue
            h1 = jnp.dot(w1_ref[...], act, preferred_element_type=jnp.float32)
            h1 = jnp.maximum(h1 + b1_ref[...], 0.0)        # (cin, HW) f32

            # ---- h1 never leaves VMEM: write into lane-padded scratch ------
            h1p_ref[0:cin, pad:pad + HW] = h1

            # ---- 9 stencil taps as static lane-offset slices (in-VMEM im2col)
            for di in range(3):                            # static, unrolled
                for dj in range(3):
                    t = di * 3 + dj
                    off = (di - 1) * W + (dj - 1)
                    tap = h1p_ref[0:cin, pad + off:pad + off + HW]
                    if dj == 0:
                        tap = jnp.where(mask_l, tap, 0.0)
                    elif dj == 2:
                        tap = jnp.where(mask_r, tap, 0.0)
                    taps_ref[t * cin:(t + 1) * cin, :] = tap

            # ---- 3x3 conv + ReLU: ONE GEMM with K = 9*cin ------------------
            taps = taps_ref[0:9 * cin, :].astype(jnp.bfloat16)
            h2 = jnp.dot(w3_ref[...], taps, preferred_element_type=jnp.float32)
            h2 = jnp.maximum(h2 + b3_ref[...], 0.0)        # (g, HW) f32

            # ---- dense concat fused into the output write ------------------
            o_ref[0, cin:cin + g, :] = h2.astype(o_ref.dtype)

    return kernel


# ----------------------------------------------------------------------------
# DenseBlock forward: the entire block is one pallas_call
# ----------------------------------------------------------------------------
def dense_block_forward(x_nchw, params):
    N, C0, H, W = x_nchw.shape
    HW = H * W
    x = x_nchw.reshape(N, C0, HW).astype(jnp.bfloat16)     # pure reshape

    schedule = []
    flat_args = [x]
    in_specs = [pl.BlockSpec((1, C0, HW), lambda n: (n, 0, 0))]
    c = C0
    flops = 0
    wbytes = 0
    for (w1, b1, w3, b3) in params:
        g = w3.shape[-1]
        schedule.append((c, g))
        flat_args += [
            jnp.transpose(w1).astype(jnp.bfloat16),                    # (out,in)
            b1.reshape(c, 1).astype(jnp.float32),
            jnp.transpose(w3.reshape(9 * c, g)).astype(jnp.bfloat16),  # (g,9c)
            b3.reshape(g, 1).astype(jnp.float32),
        ]
        in_specs += [
            pl.BlockSpec((c, c), lambda n: (0, 0)),
            pl.BlockSpec((c, 1), lambda n: (0, 0)),
            pl.BlockSpec((g, 9 * c), lambda n: (0, 0)),
            pl.BlockSpec((g, 1), lambda n: (0, 0)),
        ]
        flops += 2 * N * HW * (c * c + 9 * c * g)
        wbytes += 2 * (c * c + 9 * c * g) + 4 * (c + g)
        c += g
    c_out = c
    max_cin = max(ci for ci, _ in schedule)
    pad = W + 1

    out = pl.pallas_call(
        _make_dense_block_kernel(schedule, H, W),
        out_shape=jax.ShapeDtypeStruct((N, c_out, HW), jnp.bfloat16),
        grid_spec=pltpu.PrefetchScalarGridSpec(
            num_scalar_prefetch=0,
            grid=(N,),                   # >= 2 parallel blocks (v7x 2 TCs)
            in_specs=in_specs,
            out_specs=pl.BlockSpec((1, c_out, HW), lambda n: (n, 0, 0)),
            scratch_shapes=[
                pltpu.VMEM((max_cin, HW + 2 * pad), jnp.float32),  # padded h1
                pltpu.VMEM((9 * max_cin, HW), jnp.float32),        # im2col taps
            ],
        ),
        compiler_params=pltpu.CompilerParams(
            dimension_semantics=("parallel",)),
        cost_estimate=pl.CostEstimate(
            flops=flops, transcendentals=0,
            bytes_accessed=2 * N * HW * (C0 + c_out) + wbytes),
    )(*flat_args)

    return out.reshape(N, c_out, H, W).astype(jnp.float32)  # pure reshape


# ----------------------------------------------------------------------------
# DenseBlock parameters (deterministic synthetic init)
# ----------------------------------------------------------------------------
def init_dense_block(key, n_inputs, n_outputs, depth):
    """Per layer: (w1 (C,C) as (in,out), b1 (C,), w3 (3,3,C,growth), b3 (growth,))."""
    params = []
    future_growth = n_outputs - n_inputs
    c = n_inputs
    for d in range(depth):
        growth = future_growth // (depth - d)
        key, k1, k2, k3, k4 = jax.random.split(key, 5)
        w1 = 0.1 * jax.random.normal(k1, (c, c), jnp.float32)
        b1 = 0.1 * jax.random.normal(k2, (c,), jnp.float32)
        w3 = 0.1 * jax.random.normal(k3, (3, 3, c, growth), jnp.float32)
        b3 = 0.1 * jax.random.normal(k4, (growth,), jnp.float32)
        params.append((w1, b1, w3, b3))
        c += growth
        future_growth -= growth
    return params


# ----------------------------------------------------------------------------
# Plain-JAX reference (lax.conv, f32) for correctness checking.
# Uses the same bf16-rounded inputs/weights the kernel sees, so the residual
# difference is only the kernel's bf16 rounding of intermediates.
# ----------------------------------------------------------------------------
def ref_dense_block(x_nchw, params):
    rnd = lambda a: a.astype(jnp.bfloat16).astype(jnp.float32)
    x = rnd(x_nchw)
    dn = ('NCHW', 'OIHW', 'NCHW')
    hp = jax.lax.Precision.HIGHEST
    for (w1, b1, w3, b3) in params:
        w1r, w3r = rnd(w1), rnd(w3)
        h = jax.lax.conv_general_dilated(
            x, jnp.transpose(w1r)[:, :, None, None], (1, 1), 'VALID',
            dimension_numbers=dn, precision=hp)
        h = jax.nn.relu(h + b1[None, :, None, None])
        h = jax.lax.conv_general_dilated(
            h, jnp.transpose(w3r, (3, 2, 0, 1)), (1, 1), 'SAME',
            dimension_numbers=dn, precision=hp)
        h = jax.nn.relu(h + b3[None, :, None, None])
        x = jnp.concatenate([x, h], axis=1)
    return x


# TODO(synk): Base.set_temperature / enable_hard_round only toggle attributes on
# child modules and have no effect on this forward pass; not represented here.

if __name__ == "__main__":
    # args.densenet_depth = 2, n_inputs = 4, n_outputs = 8, N=2, H=W=16
    DEPTH, N_IN, N_OUT = 2, 4, 8
    key = jax.random.PRNGKey(0)
    key, kx, kp = jax.random.split(key, 3)
    x = jax.random.normal(kx, (2, N_IN, 16, 16), jnp.float32)

    params = init_dense_block(kp, N_IN, N_OUT, DEPTH)

    out = jax.jit(lambda a: dense_block_forward(a, params))(x)
    out = jax.block_until_ready(out)

    ref = ref_dense_block(x, params)
    assert out.shape == (2, N_OUT, 16, 16), out.shape
    max_err = float(jnp.max(jnp.abs(out - ref)))
    # bf16 activations/weights vs f32 reference -> small rounding residual.
    assert max_err < 5e-2, max_err
    print("KERNEL_OK")
</pallas_src>

<mosaic_0001>
module attributes {stable_mosaic.version = 11 : i64} {
  func.func @kernel(%arg0: i32, %arg1: memref<1x4x256xbf16, #tpu.memory_space<vmem>>, %arg2: memref<4x4xbf16, #tpu.memory_space<vmem>>, %arg3: memref<4x1xf32, #tpu.memory_space<vmem>>, %arg4: memref<2x36xbf16, #tpu.memory_space<vmem>>, %arg5: memref<2x1xf32, #tpu.memory_space<vmem>>, %arg6: memref<6x6xbf16, #tpu.memory_space<vmem>>, %arg7: memref<6x1xf32, #tpu.memory_space<vmem>>, %arg8: memref<2x54xbf16, #tpu.memory_space<vmem>>, %arg9: memref<2x1xf32, #tpu.memory_space<vmem>>, %arg10: memref<1x8x256xbf16, #tpu.memory_space<vmem>>, %arg11: memref<6x290xf32, #tpu.memory_space<vmem>>, %arg12: memref<54x256xf32, #tpu.memory_space<vmem>>) attributes {dimension_semantics = [#tpu.dimension_semantics<parallel>], iteration_bounds = array<i64: 2>, scalar_prefetch = 0 : i64, scratch_operands = 2 : i64, tpu.core_type = #tpu.core_type<tc>, window_params = [{transform_indices = @transform_0, window_bounds = array<i64: 1, 4, 256>}, {pipeline_mode = #tpu.pipeline_mode<synchronous>, transform_indices = @transform_1, window_bounds = array<i64: 4, 4>}, {pipeline_mode = #tpu.pipeline_mode<synchronous>, transform_indices = @transform_2, window_bounds = array<i64: 4, 1>}, {pipeline_mode = #tpu.pipeline_mode<synchronous>, transform_indices = @transform_3, window_bounds = array<i64: 2, 36>}, {pipeline_mode = #tpu.pipeline_mode<synchronous>, transform_indices = @transform_4, window_bounds = array<i64: 2, 1>}, {pipeline_mode = #tpu.pipeline_mode<synchronous>, transform_indices = @transform_5, window_bounds = array<i64: 6, 6>}, {pipeline_mode = #tpu.pipeline_mode<synchronous>, transform_indices = @transform_6, window_bounds = array<i64: 6, 1>}, {pipeline_mode = #tpu.pipeline_mode<synchronous>, transform_indices = @transform_7, window_bounds = array<i64: 2, 54>}, {pipeline_mode = #tpu.pipeline_mode<synchronous>, transform_indices = @transform_8, window_bounds = array<i64: 2, 1>}, {transform_indices = @transform_9, window_bounds = array<i64: 1, 8, 256>}]} {
    %0 = tpu.iota {dimensions = array<i32: 1>} : vector<1x256xi32>
    %c16_i32 = arith.constant 16 : i32
    %c0_i32 = arith.constant 0 : i32
    %1 = arith.cmpi eq, %c16_i32, %c0_i32 : i32
    %c1_i32 = arith.constant 1 : i32
    %2 = arith.select %1, %c1_i32, %c16_i32 : i32
    %3 = vector.broadcast %2 : i32 to vector<1x256xi32>
    %4 = arith.remsi %0, %3 : vector<1x256xi32>
    %c0_i32_0 = arith.constant 0 : i32
    %5 = vector.broadcast %c0_i32_0 : i32 to vector<1x256xi32>
    %6 = arith.cmpi ne, %4, %5 : vector<1x256xi32>
    %c0_i32_1 = arith.constant 0 : i32
    %7 = vector.broadcast %c0_i32_1 : i32 to vector<1x256xi32>
    %8 = arith.cmpi slt, %4, %7 : vector<1x256xi32>
    %c0_i32_2 = arith.constant 0 : i32
    %9 = arith.cmpi slt, %2, %c0_i32_2 : i32
    %10 = vector.broadcast %9 : i1 to vector<1x256xi1>
    %11 = vector.broadcast %10 : vector<1x256xi1> to vector<1x256xi1>
    %12 = arith.xori %8, %11 : vector<1x256xi1>
    %13 = arith.andi %12, %6 : vector<1x256xi1>
    %14 = vector.broadcast %2 : i32 to vector<1x256xi32>
    %15 = arith.addi %4, %14 : vector<1x256xi32>
    %16 = arith.select %13, %15, %4 : vector<1x256xi1>, vector<1x256xi32>
    %c1_i32_3 = arith.constant 1 : i32
    %17 = vector.broadcast %c1_i32_3 : i32 to vector<1x256xi32>
    %18 = arith.cmpi sge, %16, %17 : vector<1x256xi32>
    %c14_i32 = arith.constant 14 : i32
    %19 = vector.broadcast %c14_i32 : i32 to vector<1x256xi32>
    %20 = arith.cmpi sle, %16, %19 : vector<1x256xi32>
    %cst = arith.constant 0.000000e+00 : f32
    %21 = vector.broadcast %cst : f32 to vector<6x290xf32>
    %c0 = arith.constant 0 : index
    %c0_4 = arith.constant 0 : index
    %22 = vector.load %arg11[%c0, %c0_4] : memref<6x290xf32, #tpu.memory_space<vmem>>, vector<6x290xf32>
    tpu.vector_store %arg11[%c0, %c0_4], %21 {strides = array<i32>} : memref<6x290xf32, #tpu.memory_space<vmem>>, vector<6x290xf32>,
    %c0_5 = arith.constant 0 : index
    %c0_6 = arith.constant 0 : index
    %c0_7 = arith.constant 0 : index
    %23 = vector.load %arg1[%c0_5, %c0_6, %c0_7] : memref<1x4x256xbf16, #tpu.memory_space<vmem>>, vector<1x4x256xbf16>
    %24 = vector.shape_cast %23 : vector<1x4x256xbf16> to vector<4x256xbf16>
    %c0_8 = arith.constant 0 : index
    %c0_9 = arith.constant 0 : index
    %c0_10 = arith.constant 0 : index
    %25 = vector.load %arg10[%c0_8, %c0_9, %c0_10] : memref<1x8x256xbf16, #tpu.memory_space<vmem>>, vector<1x4x256xbf16>
    %26 = vector.shape_cast %25 : vector<1x4x256xbf16> to vector<4x256xbf16>
    %27 = vector.shape_cast %24 : vector<4x256xbf16> to vector<1x4x256xbf16>
    tpu.vector_store %arg10[%c0_8, %c0_9, %c0_10], %27 {strides = array<i32>} : memref<1x8x256xbf16, #tpu.memory_space<vmem>>, vector<1x4x256xbf16>,
    %c0_11 = arith.constant 0 : index
    %c0_12 = arith.constant 0 : index
    %c0_13 = arith.constant 0 : index
    %28 = vector.load %arg10[%c0_11, %c0_12, %c0_13] : memref<1x8x256xbf16, #tpu.memory_space<vmem>>, vector<1x4x256xbf16>
    %29 = vector.shape_cast %28 : vector<1x4x256xbf16> to vector<4x256xbf16>
    %c0_14 = arith.constant 0 : index
    %c0_15 = arith.constant 0 : index
    %30 = vector.load %arg2[%c0_14, %c0_15] : memref<4x4xbf16, #tpu.memory_space<vmem>>, vector<4x4xbf16>
    %cst_16 = arith.constant dense<0.000000e+00> : vector<4x256xf32>
    %31 = tpu.matmul %30, %29, %cst_16 {dimension_numbers = #tpu.dot_dimension_numbers<[1], [0], [0], [1], [0, 0, 1, 1], [], []>} : vector<4x4xbf16>, vector<4x256xbf16>, vector<4x256xf32> -> vector<4x256xf32>
    %c0_17 = arith.constant 0 : index
    %c0_18 = arith.constant 0 : index
    %32 = vector.load %arg3[%c0_17, %c0_18] : memref<4x1xf32, #tpu.memory_space<vmem>>, vector<4x1xf32>
    %33 = vector.broadcast %32 : vector<4x1xf32> to vector<4x256xf32>
    %34 = arith.addf %31, %33 : vector<4x256xf32>
    %cst_19 = arith.constant 0.000000e+00 : f32
    %35 = vector.broadcast %cst_19 : f32 to vector<4x256xf32>
    %36 = arith.maximumf %34, %35 : vector<4x256xf32>
    %c0_20 = arith.constant 0 : index
    %c17 = arith.constant 17 : index
    %37 = vector.load %arg11[%c0_20, %c17] : memref<6x290xf32, #tpu.memory_space<vmem>>, vector<4x256xf32>
    tpu.vector_store %arg11[%c0_20, %c17], %36 {strides = array<i32>} : memref<6x290xf32, #tpu.memory_space<vmem>>, vector<4x256xf32>,
    %c0_21 = arith.constant 0 : index
    %c0_22 = arith.constant 0 : index
    %38 = vector.load %arg11[%c0_21, %c0_22] : memref<6x290xf32, #tpu.memory_space<vmem>>, vector<4x256xf32>
    %cst_23 = arith.constant 0.000000e+00 : f32
    %39 = vector.shape_cast %18 : vector<1x256xi1> to vector<1x256xi1>
    %40 = vector.broadcast %39 : vector<1x256xi1> to vector<4x256xi1>
    %41 = vector.broadcast %cst_23 : f32 to vector<4x256xf32>
    %42 = arith.select %40, %38, %41 : vector<4x256xi1>, vector<4x256xf32>
    %c0_24 = arith.constant 0 : index
    %c0_25 = arith.constant 0 : index
    %43 = vector.load %arg12[%c0_24, %c0_25] : memref<54x256xf32, #tpu.memory_space<vmem>>, vector<4x256xf32>
    tpu.vector_store %arg12[%c0_24, %c0_25], %42 {strides = array<i32>} : memref<54x256xf32, #tpu.memory_space<vmem>>, vector<4x256xf32>,
    %c0_26 = arith.constant 0 : index
    %c1 = arith.constant 1 : index
    %44 = vector.load %arg11[%c0_26, %c1] : memref<6x290xf32, #tpu.memory_space<vmem>>, vector<4x256xf32>
    %c4 = arith.constant 4 : index
    %c0_27 = arith.constant 0 : index
    %45 = vector.load %arg12[%c4, %c0_27] : memref<54x256xf32, #tpu.memory_space<vmem>>, vector<4x256xf32>
    tpu.vector_store %arg12[%c4, %c0_27], %44 {strides = array<i32>} : memref<54x256xf32, #tpu.memory_space<vmem>>, vector<4x256xf32>,
    %c0_28 = arith.constant 0 : index
    %c2 = arith.constant 2 : index
    %46 = vector.load %arg11[%c0_28, %c2] : memref<6x290xf32, #tpu.memory_space<vmem>>, vector<4x256xf32>
    %cst_29 = arith.constant 0.000000e+00 : f32
    %47 = vector.shape_cast %20 : vector<1x256xi1> to vector<1x256xi1>
    %48 = vector.broadcast %47 : vector<1x256xi1> to vector<4x256xi1>
    %49 = vector.broadcast %cst_29 : f32 to vector<4x256xf32>
    %50 = arith.select %48, %46, %49 : vector<4x256xi1>, vector<4x256xf32>
    %c8 = arith.constant 8 : index
    %c0_30 = arith.constant 0 : index
    %51 = vector.load %arg12[%c8, %c0_30] : memref<54x256xf32, #tpu.memory_space<vmem>>, vector<4x256xf32>
    tpu.vector_store %arg12[%c8, %c0_30], %50 {strides = array<i32>} : memref<54x256xf32, #tpu.memory_space<vmem>>, vector<4x256xf32>,
    %c0_31 = arith.constant 0 : index
    %c16 = arith.constant 16 : index
    %52 = vector.load %arg11[%c0_31, %c16] : memref<6x290xf32, #tpu.memory_space<vmem>>, vector<4x256xf32>
    %cst_32 = arith.constant 0.000000e+00 : f32
    %53 = vector.shape_cast %18 : vector<1x256xi1> to vector<1x256xi1>
    %54 = vector.broadcast %53 : vector<1x256xi1> to vector<4x256xi1>
    %55 = vector.broadcast %cst_32 : f32 to vector<4x256xf32>
    %56 = arith.select %54, %52, %55 : vector<4x256xi1>, vector<4x256xf32>
    %c12 = arith.constant 12 : index
    %c0_33 = arith.constant 0 : index
    %57 = vector.load %arg12[%c12, %c0_33] : memref<54x256xf32, #tpu.memory_space<vmem>>, vector<4x256xf32>
    tpu.vector_store %arg12[%c12, %c0_33], %56 {strides = array<i32>} : memref<54x256xf32, #tpu.memory_space<vmem>>, vector<4x256xf32>,
    %c0_34 = arith.constant 0 : index
    %c17_35 = arith.constant 17 : index
    %58 = vector.load %arg11[%c0_34, %c17_35] : memref<6x290xf32, #tpu.memory_space<vmem>>, vector<4x256xf32>
    %c16_36 = arith.constant 16 : index
    %c0_37 = arith.constant 0 : index
    %59 = vector.load %arg12[%c16_36, %c0_37] : memref<54x256xf32, #tpu.memory_space<vmem>>, vector<4x256xf32>
    tpu.vector_store %arg12[%c16_36, %c0_37], %58 {strides = array<i32>} : memref<54x256xf32, #tpu.memory_space<vmem>>, vector<4x256xf32>,
    %c0_38 = arith.constant 0 : index
    %c18 = arith.constant 18 : index
    %60 = vector.load %arg11[%c0_38, %c18] : memref<6x290xf32, #tpu.memory_space<vmem>>, vector<4x256xf32>
    %cst_39 = arith.constant 0.000000e+00 : f32
    %61 = vector.shape_cast %20 : vector<1x256xi1> to vector<1x256xi1>
    %62 = vector.broadcast %61 : vector<1x256xi1> to vector<4x256xi1>
    %63 = vector.broadcast %cst_39 : f32 to vector<4x256xf32>
    %64 = arith.select %62, %60, %63 : vector<4x256xi1>, vector<4x256xf32>
    %c20 = arith.constant 20 : index
    %c0_40 = arith.constant 0 : index
    %65 = vector.load %arg12[%c20, %c0_40] : memref<54x256xf32, #tpu.memory_space<vmem>>, vector<4x256xf32>
    tpu.vector_store %arg12[%c20, %c0_40], %64 {strides = array<i32>} : memref<54x256xf32, #tpu.memory_space<vmem>>, vector<4x256xf32>,
    %c0_41 = arith.constant 0 : index
    %c32 = arith.constant 32 : index
    %66 = vector.load %arg11[%c0_41, %c32] : memref<6x290xf32, #tpu.memory_space<vmem>>, vector<4x256xf32>
    %cst_42 = arith.constant 0.000000e+00 : f32
    %67 = vector.shape_cast %18 : vector<1x256xi1> to vector<1x256xi1>
    %68 = vector.broadcast %67 : vector<1x256xi1> to vector<4x256xi1>
    %69 = vector.broadcast %cst_42 : f32 to vector<4x256xf32>
    %70 = arith.select %68, %66, %69 : vector<4x256xi1>, vector<4x256xf32>
    %c24 = arith.constant 24 : index
    %c0_43 = arith.constant 0 : index
    %71 = vector.load %arg12[%c24, %c0_43] : memref<54x256xf32, #tpu.memory_space<vmem>>, vector<4x256xf32>
    tpu.vector_store %arg12[%c24, %c0_43], %70 {strides = array<i32>} : memref<54x256xf32, #tpu.memory_space<vmem>>, vector<4x256xf32>,
    %c0_44 = arith.constant 0 : index
    %c33 = arith.constant 33 : index
    %72 = vector.load %arg11[%c0_44, %c33] : memref<6x290xf32, #tpu.memory_space<vmem>>, vector<4x256xf32>
    %c28 = arith.constant 28 : index
    %c0_45 = arith.constant 0 : index
    %73 = vector.load %arg12[%c28, %c0_45] : memref<54x256xf32, #tpu.memory_space<vmem>>, vector<4x256xf32>
    tpu.vector_store %arg12[%c28, %c0_45], %72 {strides = array<i32>} : memref<54x256xf32, #tpu.memory_space<vmem>>, vector<4x256xf32>,
    %c0_46 = arith.constant 0 : index
    %c34 = arith.constant 34 : index
    %74 = vector.load %arg11[%c0_46, %c34] : memref<6x290xf32, #tpu.memory_space<vmem>>, vector<4x256xf32>
    %cst_47 = arith.constant 0.000000e+00 : f32
    %75 = vector.shape_cast %20 : vector<1x256xi1> to vector<1x256xi1>
    %76 = vector.broadcast %75 : vector<1x256xi1> to vector<4x256xi1>
    %77 = vector.broadcast %cst_47 : f32 to vector<4x256xf32>
    %78 = arith.select %76, %74, %77 : vector<4x256xi1>, vector<4x256xf32>
    %c32_48 = arith.constant 32 : index
    %c0_49 = arith.constant 0 : index
    %79 = vector.load %arg12[%c32_48, %c0_49] : memref<54x256xf32, #tpu.memory_space<vmem>>, vector<4x256xf32>
    tpu.vector_store %arg12[%c32_48, %c0_49], %78 {strides = array<i32>} : memref<54x256xf32, #tpu.memory_space<vmem>>, vector<4x256xf32>,
    %c0_50 = arith.constant 0 : index
    %c0_51 = arith.constant 0 : index
    %80 = vector.load %arg12[%c0_50, %c0_51] : memref<54x256xf32, #tpu.memory_space<vmem>>, vector<36x256xf32>
    %81 = arith.truncf %80 : vector<36x256xf32> to vector<36x256xbf16>
    %c0_52 = arith.constant 0 : index
    %c0_53 = arith.constant 0 : index
    %82 = vector.load %arg4[%c0_52, %c0_53] : memref<2x36xbf16, #tpu.memory_space<vmem>>, vector<2x36xbf16>
    %cst_54 = arith.constant dense<0.000000e+00> : vector<2x256xf32>
    %83 = tpu.matmul %82, %81, %cst_54 {dimension_numbers = #tpu.dot_dimension_numbers<[1], [0], [0], [1], [0, 0, 1, 1], [], []>} : vector<2x36xbf16>, vector<36x256xbf16>, vector<2x256xf32> -> vector<2x256xf32>
    %c0_55 = arith.constant 0 : index
    %c0_56 = arith.constant 0 : index
    %84 = vector.load %arg5[%c0_55, %c0_56] : memref<2x1xf32, #tpu.memory_space<vmem>>, vector<2x1xf32>
    %85 = vector.broadcast %84 : vector<2x1xf32> to vector<2x256xf32>
    %86 = arith.addf %83, %85 : vector<2x256xf32>
    %cst_57 = arith.constant 0.000000e+00 : f32
    %87 = vector.broadcast %cst_57 : f32 to vector<2x256xf32>
    %88 = arith.maximumf %86, %87 : vector<2x256xf32>
    %89 = arith.truncf %88 : vector<2x256xf32> to vector<2x256xbf16>
    %c0_58 = arith.constant 0 : index
    %c4_59 = arith.constant 4 : index
    %c0_60 = arith.constant 0 : index
    %90 = vector.load %arg10[%c0_58, %c4_59, %c0_60] : memref<1x8x256xbf16, #tpu.memory_space<vmem>>, vector<1x2x256xbf16>
    %91 = vector.shape_cast %90 : vector<1x2x256xbf16> to vector<2x256xbf16>
    %92 = vector.shape_cast %89 : vector<2x256xbf16> to vector<1x2x256xbf16>
    tpu.vector_store %arg10[%c0_58, %c4_59, %c0_60], %92 {strides = array<i32>} : memref<1x8x256xbf16, #tpu.memory_space<vmem>>, vector<1x2x256xbf16>,
    %c0_61 = arith.constant 0 : index
    %c0_62 = arith.constant 0 : index
    %c0_63 = arith.constant 0 : index
    %93 = vector.load %arg10[%c0_61, %c0_62, %c0_63] : memref<1x8x256xbf16, #tpu.memory_space<vmem>>, vector<1x6x256xbf16>
    %94 = vector.shape_cast %93 : vector<1x6x256xbf16> to vector<6x256xbf16>
    %c0_64 = arith.constant 0 : index
    %c0_65 = arith.constant 0 : index
    %95 = vector.load %arg6[%c0_64, %c0_65] : memref<6x6xbf16, #tpu.memory_space<vmem>>, vector<6x6xbf16>
    %cst_66 = arith.constant dense<0.000000e+00> : vector<6x256xf32>
    %96 = tpu.matmul %95, %94, %cst_66 {dimension_numbers = #tpu.dot_dimension_numbers<[1], [0], [0], [1], [0, 0, 1, 1], [], []>} : vector<6x6xbf16>, vector<6x256xbf16>, vector<6x256xf32> -> vector<6x256xf32>
    %c0_67 = arith.constant 0 : index
    %c0_68 = arith.constant 0 : index
    %97 = vector.load %arg7[%c0_67, %c0_68] : memref<6x1xf32, #tpu.memory_space<vmem>>, vector<6x1xf32>
    %98 = vector.broadcast %97 : vector<6x1xf32> to vector<6x256xf32>
    %99 = arith.addf %96, %98 : vector<6x256xf32>
    %cst_69 = arith.constant 0.000000e+00 : f32
    %100 = vector.broadcast %cst_69 : f32 to vector<6x256xf32>
    %101 = arith.maximumf %99, %100 : vector<6x256xf32>
    %c0_70 = arith.constant 0 : index
    %c17_71 = arith.constant 17 : index
    %102 = vector.load %arg11[%c0_70, %c17_71] : memref<6x290xf32, #tpu.memory_space<vmem>>, vector<6x256xf32>
    tpu.vector_store %arg11[%c0_70, %c17_71], %101 {strides = array<i32>} : memref<6x290xf32, #tpu.memory_space<vmem>>, vector<6x256xf32>,
    %c0_72 = arith.constant 0 : index
    %c0_73 = arith.constant 0 : index
    %103 = vector.load %arg11[%c0_72, %c0_73] : memref<6x290xf32, #tpu.memory_space<vmem>>, vector<6x256xf32>
    %cst_74 = arith.constant 0.000000e+00 : f32
    %104 = vector.shape_cast %18 : vector<1x256xi1> to vector<1x256xi1>
    %105 = vector.broadcast %104 : vector<1x256xi1> to vector<6x256xi1>
    %106 = vector.broadcast %cst_74 : f32 to vector<6x256xf32>
    %107 = arith.select %105, %103, %106 : vector<6x256xi1>, vector<6x256xf32>
    %c0_75 = arith.constant 0 : index
    %c0_76 = arith.constant 0 : index
    %108 = vector.load %arg12[%c0_75, %c0_76] : memref<54x256xf32, #tpu.memory_space<vmem>>, vector<6x256xf32>
    tpu.vector_store %arg12[%c0_75, %c0_76], %107 {strides = array<i32>} : memref<54x256xf32, #tpu.memory_space<vmem>>, vector<6x256xf32>,
    %c0_77 = arith.constant 0 : index
    %c1_78 = arith.constant 1 : index
    %109 = vector.load %arg11[%c0_77, %c1_78] : memref<6x290xf32, #tpu.memory_space<vmem>>, vector<6x256xf32>
    %c6 = arith.constant 6 : index
    %c0_79 = arith.constant 0 : index
    %110 = vector.load %arg12[%c6, %c0_79] : memref<54x256xf32, #tpu.memory_space<vmem>>, vector<6x256xf32>
    tpu.vector_store %arg12[%c6, %c0_79], %109 {strides = array<i32>} : memref<54x256xf32, #tpu.memory_space<vmem>>, vector<6x256xf32>,
    %c0_80 = arith.constant 0 : index
    %c2_81 = arith.constant 2 : index
    %111 = vector.load %arg11[%c0_80, %c2_81] : memref<6x290xf32, #tpu.memory_space<vmem>>, vector<6x256xf32>
    %cst_82 = arith.constant 0.000000e+00 : f32
    %112 = vector.shape_cast %20 : vector<1x256xi1> to vector<1x256xi1>
    %113 = vector.broadcast %112 : vector<1x256xi1> to vector<6x256xi1>
    %114 = vector.broadcast %cst_82 : f32 to vector<6x256xf32>
    %115 = arith.select %113, %111, %114 : vector<6x256xi1>, vector<6x256xf32>
    %c12_83 = arith.constant 12 : index
    %c0_84 = arith.constant 0 : index
    %116 = vector.load %arg12[%c12_83, %c0_84] : memref<54x256xf32, #tpu.memory_space<vmem>>, vector<6x256xf32>
    tpu.vector_store %arg12[%c12_83, %c0_84], %115 {strides = array<i32>} : memref<54x256xf32, #tpu.memory_space<vmem>>, vector<6x256xf32>,
    %c0_85 = arith.constant 0 : index
    %c16_86 = arith.constant 16 : index
    %117 = vector.load %arg11[%c0_85, %c16_86] : memref<6x290xf32, #tpu.memory_space<vmem>>, vector<6x256xf32>
    %cst_87 = arith.constant 0.000000e+00 : f32
    %118 = vector.shape_cast %18 : vector<1x256xi1> to vector<1x256xi1>
    %119 = vector.broadcast %118 : vector<1x256xi1> to vector<6x256xi1>
    %120 = vector.broadcast %cst_87 : f32 to vector<6x256xf32>
    %121 = arith.select %119, %117, %120 : vector<6x256xi1>, vector<6x256xf32>
    %c18_88 = arith.constant 18 : index
    %c0_89 = arith.constant 0 : index
    %122 = vector.load %arg12[%c18_88, %c0_89] : memref<54x256xf32, #tpu.memory_space<vmem>>, vector<6x256xf32>
    tpu.vector_store %arg12[%c18_88, %c0_89], %121 {strides = array<i32>} : memref<54x256xf32, #tpu.memory_space<vmem>>, vector<6x256xf32>,
    %c0_90 = arith.constant 0 : index
    %c17_91 = arith.constant 17 : index
    %123 = vector.load %arg11[%c0_90, %c17_91] : memref<6x290xf32, #tpu.memory_space<vmem>>, vector<6x256xf32>
    %c24_92 = arith.constant 24 : index
    %c0_93 = arith.constant 0 : index
    %124 = vector.load %arg12[%c24_92, %c0_93] : memref<54x256xf32, #tpu.memory_space<vmem>>, vector<6x256xf32>
    tpu.vector_store %arg12[%c24_92, %c0_93], %123 {strides = array<i32>} : memref<54x256xf32, #tpu.memory_space<vmem>>, vector<6x256xf32>,
    %c0_94 = arith.constant 0 : index
    %c18_95 = arith.constant 18 : index
    %125 = vector.load %arg11[%c0_94, %c18_95] : memref<6x290xf32, #tpu.memory_space<vmem>>, vector<6x256xf32>
    %cst_96 = arith.constant 0.000000e+00 : f32
    %126 = vector.shape_cast %20 : vector<1x256xi1> to vector<1x256xi1>
    %127 = vector.broadcast %126 : vector<1x256xi1> to vector<6x256xi1>
    %128 = vector.broadcast %cst_96 : f32 to vector<6x256xf32>
    %129 = arith.select %127, %125, %128 : vector<6x256xi1>, vector<6x256xf32>
    %c30 = arith.constant 30 : index
    %c0_97 = arith.constant 0 : index
    %130 = vector.load %arg12[%c30, %c0_97] : memref<54x256xf32, #tpu.memory_space<vmem>>, vector<6x256xf32>
    tpu.vector_store %arg12[%c30, %c0_97], %129 {strides = array<i32>} : memref<54x256xf32, #tpu.memory_space<vmem>>, vector<6x256xf32>,
    %c0_98 = arith.constant 0 : index
    %c32_99 = arith.constant 32 : index
    %131 = vector.load %arg11[%c0_98, %c32_99] : memref<6x290xf32, #tpu.memory_space<vmem>>, vector<6x256xf32>
    %cst_100 = arith.constant 0.000000e+00 : f32
    %132 = vector.shape_cast %18 : vector<1x256xi1> to vector<1x256xi1>
    %133 = vector.broadcast %132 : vector<1x256xi1> to vector<6x256xi1>
    %134 = vector.broadcast %cst_100 : f32 to vector<6x256xf32>
    %135 = arith.select %133, %131, %134 : vector<6x256xi1>, vector<6x256xf32>
    %c36 = arith.constant 36 : index
    %c0_101 = arith.constant 0 : index
    %136 = vector.load %arg12[%c36, %c0_101] : memref<54x256xf32, #tpu.memory_space<vmem>>, vector<6x256xf32>
    tpu.vector_store %arg12[%c36, %c0_101], %135 {strides = array<i32>} : memref<54x256xf32, #tpu.memory_space<vmem>>, vector<6x256xf32>,
    %c0_102 = arith.constant 0 : index
    %c33_103 = arith.constant 33 : index
    %137 = vector.load %arg11[%c0_102, %c33_103] : memref<6x290xf32, #tpu.memory_space<vmem>>, vector<6x256xf32>
    %c42 = arith.constant 42 : index
    %c0_104 = arith.constant 0 : index
    %138 = vector.load %arg12[%c42, %c0_104] : memref<54x256xf32, #tpu.memory_space<vmem>>, vector<6x256xf32>
    tpu.vector_store %arg12[%c42, %c0_104], %137 {strides = array<i32>} : memref<54x256xf32, #tpu.memory_space<vmem>>, vector<6x256xf32>,
    %c0_105 = arith.constant 0 : index
    %c34_106 = arith.constant 34 : index
    %139 = vector.load %arg11[%c0_105, %c34_106] : memref<6x290xf32, #tpu.memory_space<vmem>>, vector<6x256xf32>
    %cst_107 = arith.constant 0.000000e+00 : f32
    %140 = vector.shape_cast %20 : vector<1x256xi1> to vector<1x256xi1>
    %141 = vector.broadcast %140 : vector<1x256xi1> to vector<6x256xi1>
    %142 = vector.broadcast %cst_107 : f32 to vector<6x256xf32>
    %143 = arith.select %141, %139, %142 : vector<6x256xi1>, vector<6x256xf32>
    %c48 = arith.constant 48 : index
    %c0_108 = arith.constant 0 : index
    %144 = vector.load %arg12[%c48, %c0_108] : memref<54x256xf32, #tpu.memory_space<vmem>>, vector<6x256xf32>
    tpu.vector_store %arg12[%c48, %c0_108], %143 {strides = array<i32>} : memref<54x256xf32, #tpu.memory_space<vmem>>, vector<6x256xf32>,
    %c0_109 = arith.constant 0 : index
    %c0_110 = arith.constant 0 : index
    %145 = vector.load %arg12[%c0_109, %c0_110] : memref<54x256xf32, #tpu.memory_space<vmem>>, vector<54x256xf32>
    %146 = arith.truncf %145 : vector<54x256xf32> to vector<54x256xbf16>
    %c0_111 = arith.constant 0 : index
    %c0_112 = arith.constant 0 : index
    %147 = vector.load %arg8[%c0_111, %c0_112] : memref<2x54xbf16, #tpu.memory_space<vmem>>, vector<2x54xbf16>
    %cst_113 = arith.constant dense<0.000000e+00> : vector<2x256xf32>
    %148 = tpu.matmul %147, %146, %cst_113 {dimension_numbers = #tpu.dot_dimension_numbers<[1], [0], [0], [1], [0, 0, 1, 1], [], []>} : vector<2x54xbf16>, vector<54x256xbf16>, vector<2x256xf32> -> vector<2x256xf32>
    %c0_114 = arith.constant 0 : index
    %c0_115 = arith.constant 0 : index
    %149 = vector.load %arg9[%c0_114, %c0_115] : memref<2x1xf32, #tpu.memory_space<vmem>>, vector<2x1xf32>
    %150 = vector.broadcast %149 : vector<2x1xf32> to vector<2x256xf32>
    %151 = arith.addf %148, %150 : vector<2x256xf32>
    %cst_116 = arith.constant 0.000000e+00 : f32
    %152 = vector.broadcast %cst_116 : f32 to vector<2x256xf32>
    %153 = arith.maximumf %151, %152 : vector<2x256xf32>
    %154 = arith.truncf %153 : vector<2x256xf32> to vector<2x256xbf16>
    %c0_117 = arith.constant 0 : index
    %c6_118 = arith.constant 6 : index
    %c0_119 = arith.constant 0 : index
    %155 = vector.load %arg10[%c0_117, %c6_118, %c0_119] : memref<1x8x256xbf16, #tpu.memory_space<vmem>>, vector<1x2x256xbf16>
    %156 = vector.shape_cast %155 : vector<1x2x256xbf16> to vector<2x256xbf16>
    %157 = vector.shape_cast %154 : vector<2x256xbf16> to vector<1x2x256xbf16>
    tpu.vector_store %arg10[%c0_117, %c6_118, %c0_119], %157 {strides = array<i32>} : memref<1x8x256xbf16, #tpu.memory_space<vmem>>, vector<1x2x256xbf16>,
    return
  }
  func.func @transform_0(%arg0: i32) -> (i32, i32, i32) {
    %c0_i32 = arith.constant 0 : i32
    %c0_i32_0 = arith.constant 0 : i32
    %c0_i32_1 = arith.constant 0 : i32
    return %arg0, %c0_i32, %c0_i32_0 : i32, i32, i32
  }
  func.func @transform_1(%arg0: i32) -> (i32, i32) {
    %c0_i32 = arith.constant 0 : i32
    %c0_i32_0 = arith.constant 0 : i32
    %c0_i32_1 = arith.constant 0 : i32
    return %c0_i32, %c0_i32_0 : i32, i32
  }
  func.func @transform_2(%arg0: i32) -> (i32, i32) {
    %c0_i32 = arith.constant 0 : i32
    %c0_i32_0 = arith.constant 0 : i32
    %c0_i32_1 = arith.constant 0 : i32
    return %c0_i32, %c0_i32_0 : i32, i32
  }
  func.func @transform_3(%arg0: i32) -> (i32, i32) {
    %c0_i32 = arith.constant 0 : i32
    %c0_i32_0 = arith.constant 0 : i32
    %c0_i32_1 = arith.constant 0 : i32
    return %c0_i32, %c0_i32_0 : i32, i32
  }
  func.func @transform_4(%arg0: i32) -> (i32, i32) {
    %c0_i32 = arith.constant 0 : i32
    %c0_i32_0 = arith.constant 0 : i32
    %c0_i32_1 = arith.constant 0 : i32
    return %c0_i32, %c0_i32_0 : i32, i32
  }
  func.func @transform_5(%arg0: i32) -> (i32, i32) {
    %c0_i32 = arith.constant 0 : i32
    %c0_i32_0 = arith.constant 0 : i32
    %c0_i32_1 = arith.constant 0 : i32
    return %c0_i32, %c0_i32_0 : i32, i32
  }
  func.func @transform_6(%arg0: i32) -> (i32, i32) {
    %c0_i32 = arith.constant 0 : i32
    %c0_i32_0 = arith.constant 0 : i32
    %c0_i32_1 = arith.constant 0 : i32
    return %c0_i32, %c0_i32_0 : i32, i32
  }
  func.func @transform_7(%arg0: i32) -> (i32, i32) {
    %c0_i32 = arith.constant 0 : i32
    %c0_i32_0 = arith.constant 0 : i32
    %c0_i32_1 = arith.constant 0 : i32
    return %c0_i32, %c0_i32_0 : i32, i32
  }
  func.func @transform_8(%arg0: i32) -> (i32, i32) {
    %c0_i32 = arith.constant 0 : i32
    %c0_i32_0 = arith.constant 0 : i32
    %c0_i32_1 = arith.constant 0 : i32
    return %c0_i32, %c0_i32_0 : i32, i32
  }
  func.func @transform_9(%arg0: i32) -> (i32, i32, i32) {
    %c0_i32 = arith.constant 0 : i32
    %c0_i32_0 = arith.constant 0 : i32
    %c0_i32_1 = arith.constant 0 : i32
    return %arg0, %c0_i32, %c0_i32_0 : i32, i32, i32
  }
}

</mosaic_0001>

<llo_original>
// kernel: _lambda_.1
$region0: #{_lambda_.1}
  #allocation0 [shape = 'u32[]', space=smem, size = 0x4, offset = 0x4, fixed_abs, tag = 'smem constant byte address 0x4 - core index']
  #allocation1 [shape = 'u32[72,128]{1,0:T(1,128)}', space=vmem, size = 0x9000, scoped, tag = 'internal scratch']
  #allocation2 [shape = 'f32[6,290]{1,0:T(8,128)}', space=vmem, size = 0x3000, scoped, tag = 'scratch operand']
  #allocation3 [shape = 'f32[54,256]{1,0:T(8,128)}', space=vmem, size = 0xe000, scoped, tag = 'scratch operand']
  %s0 = inlined_call_operand.vmem [shape: bf16[2,4,256], index: 0, kind: input, shape index: {}]
  %s1 = inlined_call_operand.vmem [shape: bf16[4,4], index: 1, kind: input, shape index: {}]
  %s2 = inlined_call_operand.vmem [shape: f32[4,1], index: 2, kind: input, shape index: {}]
  %s3 = inlined_call_operand.vmem [shape: bf16[2,36], index: 3, kind: input, shape index: {}]
  %s4 = inlined_call_operand.vmem [shape: f32[2,1], index: 4, kind: input, shape index: {}]
  %s5 = inlined_call_operand.vmem [shape: bf16[6,6], index: 5, kind: input, shape index: {}]
  %s6 = inlined_call_operand.vmem [shape: f32[6,1], index: 6, kind: input, shape index: {}]
  %s7 = inlined_call_operand.vmem [shape: bf16[2,54], index: 7, kind: input, shape index: {}]
  %s8 = inlined_call_operand.vmem [shape: f32[2,1], index: 8, kind: input, shape index: {}]
  %s9 = inlined_call_operand.vmem [shape: bf16[2,8,256], index: 9, kind: output, shape index: {}]
  %s10 = sld [smem:[#allocation0]]
  $region69: #{_lambda_.1} parent=0
    _
  %s12 = ssub.s32 1, %s10
  %s13 = scalar_select 0, %s12, %s10
  loop: start=0, step=1, limit=4
  $region2: #{_lambda_.1} parent=0 // loop_pre_header
    _
  $region3: #{_lambda_.1} parent=0 // loop_header
    %s15 = sphi 0, %s19
    %p16 = scmp.ge.s32.totalorder %s15, 4
    %s25 = sphi 0, %s27
    %s28 = sphi 0, %s25
    %s29 = sphi 0, %s28
    %s45 = sphi 0, %s29
    %s49 = sphi 0, %s49
    %s51 = sphi 0, %s49
    %s52 = sphi 0, %s51
    %s66 = sphi 0, %s52
    %s70 = sphi 0, %s70
    %s72 = sphi 0, %s70
    %s73 = sphi 0, %s72
    %s87 = sphi 0, %s73
    %s91 = sphi 0, %s91
    %s93 = sphi 0, %s91
    %s94 = sphi 0, %s93
    %s108 = sphi 0, %s94
    %s112 = sphi 0, %s112
    %s114 = sphi 0, %s112
    %s115 = sphi 0, %s114
    %s129 = sphi 0, %s115
    %s133 = sphi 0, %s133
    %s135 = sphi 0, %s133
    %s136 = sphi 0, %s135
    %s150 = sphi 0, %s136
    %s154 = sphi 0, %s154
    %s156 = sphi 0, %s154
    %s157 = sphi 0, %s156
    %s171 = sphi 0, %s157
    %s175 = sphi 0, %s175
    %s177 = sphi 0, %s175
    %s178 = sphi 0, %s177
    %s192 = sphi 0, %s178
    %s196 = sphi 0, %s196
    %s198 = sphi 0, %s196
    %s199 = sphi 0, %s198
    %s213 = sphi 0, %s199
    %s219 = sphi 0, %s221
    %s222 = sphi 0, %s219
    %s223 = sphi 0, %s222
    %s239 = sphi 0, %s223
  $region4: #{_lambda_.1} parent=0 // loop_header_branch
    %18 = sbr.rel (%p16) target = $region8
  $region5: #{_lambda_.1} parent=0 // loop_body
    %s20 = ssub.s32 %s15, 1
    %s21 = ssub.s32 %s15, 2
    %s22 = sadd.s32 %s15, 1
    %s23 = ssub.s32 %s15, %s22
    %p24 = scmp.eq.s32.totalorder %s23, 0
    %s26 = sadd.s32 %s25, 1
    %s27 = scalar_select %p24, %s25, %s26
    %p30 = pneg %p24
    %p31 = scmp.eq.s32.totalorder %s15, 1
    %p32 = por %p30, %p31
    %p33 = scmp.ne.s32.totalorder %s25, %s28
    %p34 = scmp.eq.s32.totalorder %s15, 0
    %p35 = por %p33, %p34
    %p36 = scmp.ne.s32.totalorder %s25, %s28
    %p37 = scmp.eq.s32.totalorder %s20, 1
    %p38 = por %p36, %p37
    %p39 = scmp.ne.s32.totalorder %s28, %s29
    %p40 = scmp.eq.s32.totalorder %s20, 0
    %p41 = por %p39, %p40
    %p42 = scmp.ne.s32.totalorder %s28, %s29
    %p43 = scmp.eq.s32.totalorder %s21, 1
    %p44 = por %p42, %p43
    %p46 = scmp.ne.s32.totalorder %s29, %s45
    %p47 = scmp.eq.s32.totalorder %s21, 0
    %p48 = por %p46, %p47
    %s50 = sadd.s32 %s49, 1
    %p53 = scmp.eq.s32.totalorder %s15, 1
    %p54 = scmp.ne.s32.totalorder %s49, %s51
    %p55 = scmp.eq.s32.totalorder %s15, 0
    %p56 = por %p54, %p55
    %p57 = scmp.ne.s32.totalorder %s49, %s51
    %p58 = scmp.eq.s32.totalorder %s20, 1
    %p59 = por %p57, %p58
    %p60 = scmp.ne.s32.totalorder %s51, %s52
    %p61 = scmp.eq.s32.totalorder %s20, 0
    %p62 = por %p60, %p61
    %p63 = scmp.ne.s32.totalorder %s51, %s52
    %p64 = scmp.eq.s32.totalorder %s21, 1
    %p65 = por %p63, %p64
    %p67 = scmp.ne.s32.totalorder %s52, %s66
    %p68 = scmp.eq.s32.totalorder %s21, 0
    %p69 = por %p67, %p68
    %s71 = sadd.s32 %s70, 1
    %p74 = scmp.eq.s32.totalorder %s15, 1
    %p75 = scmp.ne.s32.totalorder %s70, %s72
    %p76 = scmp.eq.s32.totalorder %s15, 0
    %p77 = por %p75, %p76
    %p78 = scmp.ne.s32.totalorder %s70, %s72
    %p79 = scmp.eq.s32.totalorder %s20, 1
    %p80 = por %p78, %p79
    %p81 = scmp.ne.s32.totalorder %s72, %s73
    %p82 = scmp.eq.s32.totalorder %s20, 0
    %p83 = por %p81, %p82
    %p84 = scmp.ne.s32.totalorder %s72, %s73
    %p85 = scmp.eq.s32.totalorder %s21, 1
    %p86 = por %p84, %p85
    %p88 = scmp.ne.s32.totalorder %s73, %s87
    %p89 = scmp.eq.s32.totalorder %s21, 0
    %p90 = por %p88, %p89
    %s92 = sadd.s32 %s91, 1
    %p95 = scmp.eq.s32.totalorder %s15, 1
    %p96 = scmp.ne.s32.totalorder %s91, %s93
    %p97 = scmp.eq.s32.totalorder %s15, 0
    %p98 = por %p96, %p97
    %p99 = scmp.ne.s32.totalorder %s91, %s93
    %p100 = scmp.eq.s32.totalorder %s20, 1
    %p101 = por %p99, %p100
    %p102 = scmp.ne.s32.totalorder %s93, %s94
    %p103 = scmp.eq.s32.totalorder %s20, 0
    %p104 = por %p102, %p103
    %p105 = scmp.ne.s32.totalorder %s93, %s94
    %p106 = scmp.eq.s32.totalorder %s21, 1
    %p107 = por %p105, %p106
    %p109 = scmp.ne.s32.totalorder %s94, %s108
    %p110 = scmp.eq.s32.totalorder %s21, 0
    %p111 = por %p109, %p110
    %s113 = sadd.s32 %s112, 1
    %p116 = scmp.eq.s32.totalorder %s15, 1
    %p117 = scmp.ne.s32.totalorder %s112, %s114
    %p118 = scmp.eq.s32.totalorder %s15, 0
    %p119 = por %p117, %p118
    %p120 = scmp.ne.s32.totalorder %s112, %s114
    %p121 = scmp.eq.s32.totalorder %s20, 1
    %p122 = por %p120, %p121
    %p123 = scmp.ne.s32.totalorder %s114, %s115
    %p124 = scmp.eq.s32.totalorder %s20, 0
    %p125 = por %p123, %p124
    %p126 = scmp.ne.s32.totalorder %s114, %s115
    %p127 = scmp.eq.s32.totalorder %s21, 1
    %p128 = por %p126, %p127
    %p130 = scmp.ne.s32.totalorder %s115, %s129
    %p131 = scmp.eq.s32.totalorder %s21, 0
    %p132 = por %p130, %p131
    %s134 = sadd.s32 %s133, 1
    %p137 = scmp.eq.s32.totalorder %s15, 1
    %p138 = scmp.ne.s32.totalorder %s133, %s135
    %p139 = scmp.eq.s32.totalorder %s15, 0
    %p140 = por %p138, %p139
    %p141 = scmp.ne.s32.totalorder %s133, %s135
    %p142 = scmp.eq.s32.totalorder %s20, 1
    %p143 = por %p141, %p142
    %p144 = scmp.ne.s32.totalorder %s135, %s136
    %p145 = scmp.eq.s32.totalorder %s20, 0
    %p146 = por %p144, %p145
    %p147 = scmp.ne.s32.totalorder %s135, %s136
    %p148 = scmp.eq.s32.totalorder %s21, 1
    %p149 = por %p147, %p148
    %p151 = scmp.ne.s32.totalorder %s136, %s150
    %p152 = scmp.eq.s32.totalorder %s21, 0
    %p153 = por %p151, %p152
    %s155 = sadd.s32 %s154, 1
    %p158 = scmp.eq.s32.totalorder %s15, 1
    %p159 = scmp.ne.s32.totalorder %s154, %s156
    %p160 = scmp.eq.s32.totalorder %s15, 0
    %p161 = por %p159, %p160
    %p162 = scmp.ne.s32.totalorder %s154, %s156
    %p163 = scmp.eq.s32.totalorder %s20, 1
    %p164 = por %p162, %p163
    %p165 = scmp.ne.s32.totalorder %s156, %s157
    %p166 = scmp.eq.s32.totalorder %s20, 0
    %p167 = por %p165, %p166
    %p168 = scmp.ne.s32.totalorder %s156, %s157
    %p169 = scmp.eq.s32.totalorder %s21, 1
    %p170 = por %p168, %p169
    %p172 = scmp.ne.s32.totalorder %s157, %s171
    %p173 = scmp.eq.s32.totalorder %s21, 0
    %p174 = por %p172, %p173
    %s176 = sadd.s32 %s175, 1
    %p179 = scmp.eq.s32.totalorder %s15, 1
    %p180 = scmp.ne.s32.totalorder %s175, %s177
    %p181 = scmp.eq.s32.totalorder %s15, 0
    %p182 = por %p180, %p181
    %p183 = scmp.ne.s32.totalorder %s175, %s177
    %p184 = scmp.eq.s32.totalorder %s20, 1
    %p185 = por %p183, %p184
    %p186 = scmp.ne.s32.totalorder %s177, %s178
    %p187 = scmp.eq.s32.totalorder %s20, 0
    %p188 = por %p186, %p187
    %p189 = scmp.ne.s32.totalorder %s177, %s178
    %p190 = scmp.eq.s32.totalorder %s21, 1
    %p191 = por %p189, %p190
    %p193 = scmp.ne.s32.totalorder %s178, %s192
    %p194 = scmp.eq.s32.totalorder %s21, 0
    %p195 = por %p193, %p194
    %s197 = sadd.s32 %s196, 1
    %p200 = scmp.eq.s32.totalorder %s15, 1
    %p201 = scmp.ne.s32.totalorder %s196, %s198
    %p202 = scmp.eq.s32.totalorder %s15, 0
    %p203 = por %p201, %p202
    %p204 = scmp.ne.s32.totalorder %s196, %s198
    %p205 = scmp.eq.s32.totalorder %s20, 1
    %p206 = por %p204, %p205
    %p207 = scmp.ne.s32.totalorder %s198, %s199
    %p208 = scmp.eq.s32.totalorder %s20, 0
    %p209 = por %p207, %p208
    %p210 = scmp.ne.s32.totalorder %s198, %s199
    %p211 = scmp.eq.s32.totalorder %s21, 1
    %p212 = por %p210, %p211
    %p214 = scmp.ne.s32.totalorder %s199, %s213
    %p215 = scmp.eq.s32.totalorder %s21, 0
    %p216 = por %p214, %p215
    %s217 = ssub.s32 %s15, %s22
    %p218 = scmp.eq.s32.totalorder %s217, 0
    %s220 = sadd.s32 %s219, 1
    %s221 = scalar_select %p218, %s219, %s220
    %p224 = pneg %p218
    %p225 = scmp.eq.s32.totalorder %s15, 1
    %p226 = por %p224, %p225
    %p227 = scmp.ne.s32.totalorder %s219, %s222
    %p228 = scmp.eq.s32.totalorder %s15, 0
    %p229 = por %p227, %p228
    %p230 = scmp.ne.s32.totalorder %s219, %s222
    %p231 = scmp.eq.s32.totalorder %s20, 1
    %p232 = por %p230, %p231
    %p233 = scmp.ne.s32.totalorder %s222, %s223
    %p234 = scmp.eq.s32.totalorder %s20, 0
    %p235 = por %p233, %p234
    %p236 = scmp.ne.s32.totalorder %s222, %s223
    %p237 = scmp.eq.s32.totalorder %s21, 1
    %p238 = por %p236, %p237
    %p240 = scmp.ne.s32.totalorder %s223, %s239
    %p241 = scmp.eq.s32.totalorder %s21, 0
    %p242 = por %p240, %p241
    %p243 = scmp.le.s32.totalorder 1, %s15
    %p244 = scmp.lt.s32.totalorder %s15, 3
    %p245 = pnand %p243, %p244
    %p246 = pneg %p245
    // Predicated region
    $region9: #{_lambda_.1} parent=5 // pred_check
      _
    $region10: #{_lambda_.1} parent=5 // pred_check_branch
      %248 = sbr.rel (%p245) target = $region12
    $region11: #{_lambda_.1} parent=5 // pred_region
      %s249 = ssub.s32 %s15, 1
      // Predicated region
      $region13: #{_lambda_.1} parent=11 // pred_check
        %p250 = pneg %p62
      $region14: #{_lambda_.1} parent=11 // pred_check_branch
        %252 = sbr.rel (%p250) target = $region16
      $region15: #{_lambda_.1} parent=11 // pred_region
        _
      $region16: #{_lambda_.1} parent=11 // pred_fallthru
        _
      // Predicated region
      $region17: #{_lambda_.1} parent=11 // pred_check
        %p253 = pneg %p83
      $region18: #{_lambda_.1} parent=11 // pred_check_branch
        %255 = sbr.rel (%p253) target = $region20
      $region19: #{_lambda_.1} parent=11 // pred_region
        _
      $region20: #{_lambda_.1} parent=11 // pred_fallthru
        _
      // Predicated region
      $region21: #{_lambda_.1} parent=11 // pred_check
        %p256 = pneg %p104
      $region22: #{_lambda_.1} parent=11 // pred_check_branch
        %258 = sbr.rel (%p256) target = $region24
      $region23: #{_lambda_.1} parent=11 // pred_region
        _
      $region24: #{_lambda_.1} parent=11 // pred_fallthru
        _
      // Predicated region
      $region25: #{_lambda_.1} parent=11 // pred_check
        %p259 = pneg %p125
      $region26: #{_lambda_.1} parent=11 // pred_check_branch
        %261 = sbr.rel (%p259) target = $region28
      $region27: #{_lambda_.1} parent=11 // pred_region
        _
      $region28: #{_lambda_.1} parent=11 // pred_fallthru
        _
      // Predicated region
      $region29: #{_lambda_.1} parent=11 // pred_check
        %p262 = pneg %p146
      $region30: #{_lambda_.1} parent=11 // pred_check_branch
        %264 = sbr.rel (%p262) target = $region32
      $region31: #{_lambda_.1} parent=11 // pred_region
        _
      $region32: #{_lambda_.1} parent=11 // pred_fallthru
        _
      // Predicated region
      $region33: #{_lambda_.1} parent=11 // pred_check
        %p265 = pneg %p167
      $region34: #{_lambda_.1} parent=11 // pred_check_branch
        %267 = sbr.rel (%p265) target = $region36
      $region35: #{_lambda_.1} parent=11 // pred_region
        _
      $region36: #{_lambda_.1} parent=11 // pred_fallthru
        _
      // Predicated region
      $region37: #{_lambda_.1} parent=11 // pred_check
        %p268 = pneg %p188
      $region38: #{_lambda_.1} parent=11 // pred_check_branch
        %270 = sbr.rel (%p268) target = $region40
      $region39: #{_lambda_.1} parent=11 // pred_region
        _
      $region40: #{_lambda_.1} parent=11 // pred_fallthru
        _
      // Predicated region
      $region41: #{_lambda_.1} parent=11 // pred_check
        %p271 = pneg %p209
      $region42: #{_lambda_.1} parent=11 // pred_check_branch
        %273 = sbr.rel (%p271) target = $region44
      $region43: #{_lambda_.1} parent=11 // pred_region
        _
      $region44: #{_lambda_.1} parent=11 // pred_fallthru
        _
    $region12: #{_lambda_.1} parent=5 // pred_fallthru
      _
    %p274 = scmp.lt.s32.totalorder %s15, 2
    // Predicated region
    $region45: #{_lambda_.1} parent=5 // pred_check
      %p275 = pneg %p274
    $region46: #{_lambda_.1} parent=5 // pred_check_branch
      %277 = sbr.rel (%p275) target = $region48
    $region47: #{_lambda_.1} parent=5 // pred_region
      // Predicated region
      $region49: #{_lambda_.1} parent=47 // pred_check
        %p278 = pneg %p35
      $region50: #{_lambda_.1} parent=47 // pred_check_branch
        %280 = sbr.rel (%p278) target = $region52
      $region51: #{_lambda_.1} parent=47 // pred_region
        %p281 = scmp.lt.s32.totalorder %s15, 1
        %s282 = scalar_select %p281, %s15, 1
        %s283 = smul.addr %s282, 2
        %s284 = smul.addr %s283, 2
        %s285 = scalar_lea.vmem %s0, %s284
      $region52: #{_lambda_.1} parent=47 // pred_fallthru
        _
    $region48: #{_lambda_.1} parent=5 // pred_fallthru
      _
    %p286 = scmp.le.s32.totalorder 1, %s15
    %p287 = scmp.lt.s32.totalorder %s15, 3
    %p288 = pnand %p286, %p287
    %p289 = pneg %p288
    // Predicated region
    $region53: #{_lambda_.1} parent=5 // pred_check
      _
    $region54: #{_lambda_.1} parent=5 // pred_check_branch
      %291 = sbr.rel (%p288) target = $region56
    $region55: #{_lambda_.1} parent=5 // pred_region
      %s292 = ssub.s32 %s15, 1
      %p293 = scmp.lt.s32.totalorder %s20, 1
      %s294 = scalar_select %p293, %s20, 1
      %s295 = smul.addr %s294, 2
      %s296 = smul.addr %s295, 2
      %s297 = scalar_lea.vmem %s0, %s296
      %p298 = pneg %p41
      %p299 = pneg %p38
      %p300 = pneg %p62
      %p301 = pneg %p59
      %p302 = pneg %p83
      %p303 = pneg %p80
      %p304 = pneg %p104
      %p305 = pneg %p101
      %p306 = pneg %p125
      %p307 = pneg %p122
      %p308 = pneg %p146
      %p309 = pneg %p143
      %p310 = pneg %p167
      %p311 = pneg %p164
      %p312 = pneg %p188
      %p313 = pneg %p185
      %p314 = pneg %p209
      %p315 = pneg %p206
      %p316 = pneg %p235
      %p317 = pneg %p232
      %p318 = scmp.lt.s32.totalorder %s20, 1
      %s319 = scalar_select %p318, %s20, 1
      %s320 = smul.addr %s319, 2
      %s321 = smul.addr %s320, 4
      %s322 = scalar_lea.vmem %s9, %s321
      %p323 = scmp.lt.s32.totalorder %s20, 1
      %s324 = scalar_select %p323, %s20, 1
      %s325 = smul.addr %s324, 2
      %s326 = smul.addr %s325, 2
      %s327 = scalar_lea.vmem %s0, %s326
      %p328 = scmp.lt.s32.totalorder %s20, 1
      %s329 = scalar_select %p328, %s20, 1
      %s330 = smul.addr %s329, 2
      %s331 = smul.addr %s330, 4
      %s332 = scalar_lea.vmem %s9, %s331
      %v334 = vlaneseq
      %v335 = vand.u32 %v334, 127
      %v336 = vadd.s32 %v335, 128
      %vm337 = vcmp.lt.s32.totalorder %v335, 0
      %v338 = vsub.s32 0, %v335
      %v339 = vsel %vm337, %v338, %v335
      %v340 = vshrl.u32 %v339, 4
      %v341 = vand.u32 %v339, 15
      %v342 = vsub.s32 0, %v341
      %v343 = vsel %vm337, %v342, %v341
      %vm344 = vcmp.lt.s32.totalorder %v336, 0
      %v345 = vsub.s32 0, %v336
      %v346 = vsel %vm344, %v345, %v336
      %v347 = vshrl.u32 %v346, 4
      %v348 = vand.u32 %v346, 15
      %v349 = vsub.s32 0, %v348
      %v350 = vsel %vm344, %v349, %v348
      %vm351 = vcmp.ne.s32.totalorder %v343, 0
      %vm352 = vcmp.ne.s32.totalorder %v350, 0
      %vm353 = vcmp.lt.s32.totalorder %v343, 0
      %vm354 = vcmp.lt.s32.totalorder %v350, 0
      %vm355 = vmand %vm353, %vm351
      %vm356 = vmand %vm354, %vm352
      %v357 = vadd.s32 %v343, 16
      %v358 = vadd.s32 %v350, 16
      %v359 = vsel %vm355, %v357, %v343
      %v360 = vsel %vm356, %v358, %v350
      %vm361 = vcmp.ge.s32.totalorder %v359, 1
      %vm362 = vcmp.ge.s32.totalorder %v360, 1
      %vm363 = vcmp.le.s32.totalorder %v359, 14
      %vm364 = vcmp.le.s32.totalorder %v360, 14
      %365 = vst [vmem:[#allocation2] sm:$0x3f] 0.0
      %366 = vst [vmem:[#allocation2 + $0x8] sm:$0x3f] 0.0
      %vm367 = vcmask 275456
      %368 = vst.msk [vmem:[#allocation2 + $0x10] sm:$0x3f] %vm367, 0.0
      %v369 = vld [vmem:[%s327] sm:$0xf]
      %371 = vst [vmem:[#allocation1] ss:$2 sm:$0xff] %v369
      %v372 = vld.sshfl [vmem:[#allocation1] sm:$0xff pattern:$0x75643120]
      %374 = vst [vmem:[%s332] sm:$0x33] %v372
      %v375 = vld [vmem:[%s332] sm:$0x33]
      %v376 = vld [vmem:[%s1] sm:$0x3]
      %v377 = vld [vmem:[%s2] sm:$0xf]
      %379 = vset.pattern.permute.xlu0 0
      %380 = vperm.xlu0 %379, %v377
      %v381 = vpop.permute.xlu0 %380
      %v384 = vunpack.c.l.b16 %v375
      %v385 = vunpack.c.h.b16 %v375
      %v386 = vpack.c.b16 %v384, %v384
      %v387 = vpack.c.b16 %v385, %v385
      %vm388 = vcmask 31744
      %v390 = vsel %vm388, %v376, 0
      %vm392 = vcmask 1041408
      %v394 = vsel %vm392, %v386, 0
      %v397 = vsel %vm392, %v387, 0
      %399 = vmatpush.bf16.msra.mxu0 0
      %400 = vmatpush.bf16.msra.mxu0 0
      %401 = vmatpush.bf16.msra.mxu0 0
      %402 = vmatpush.bf16.msra.mxu0 0
      %403 = vmatpush.bf16.msra.mxu0 0
      %404 = vmatpush.bf16.msra.mxu0 0
      %405 = vmatpush.bf16.msra.mxu0 0
      %406 = vmatpush.bf16.msra.mxu0 %v394
      %407 = vmatmul.bf16.gmra.mxu0 %v390
      %v408 = vpop.f32.mrf.mxu0
      %v409 = vadd.f32 %v381, %v408
      %v410 = vpop.f32.mrf.mxu0
      %411 = vdwg.mxu0
      %412 = vmatpush.bf16.msra.mxu0 0
      %413 = vmatpush.bf16.msra.mxu0 0
      %414 = vmatpush.bf16.msra.mxu0 0
      %415 = vmatpush.bf16.msra.mxu0 0
      %416 = vmatpush.bf16.msra.mxu0 0
      %417 = vmatpush.bf16.msra.mxu0 0
      %418 = vmatpush.bf16.msra.mxu0 0
      %419 = vmatpush.bf16.msra.mxu0 %v397
      %420 = vmatmul.bf16.gmra.mxu0 %v390
      %v421 = vpop.f32.mrf.mxu0
      %v422 = vadd.f32 %v381, %v421
      %v423 = vpop.f32.mrf.mxu0
      %424 = vdwg.mxu0
      %v425 = vmax.f32 %v409, 0.0
      %v426 = vmax.f32 %v422, 0.0
      %429 = vrot.lane.b32.xlu0 %v425, 17
      %v430 = vpop.permute.xlu0 %429
      %431 = vrot.lane.b32.xlu0 %v426, 17
      %v432 = vpop.permute.xlu0 %431
      %vm433 = vcmask 138240
      %v434 = vsel %vm433, %v430, %v432
      %vm438 = vcmask 1043592
      %439 = vst.msk [vmem:[#allocation2] sm:$0xf] %vm438, %v430
      %440 = vst [vmem:[#allocation2 + $0x8] sm:$0xf] %v434
      %vm441 = vcmask 134144
      %442 = vst.msk [vmem:[#allocation2 + $0x10] sm:$0xf] %vm441, %v432
      %v443 = vld [vmem:[#allocation2] sm:$0xf]
      %v444 = vld [vmem:[#allocation2 + $0x8] sm:$0xf]
      %v445 = vsel %vm361, 1, 0
      %v446 = vsel %vm362, 1, 0
      %vm447 = vcmp.eq.s32.totalorder %v445, 1
      %vm448 = vcmp.eq.s32.totalorder %v446, 1
      %v449 = vsel %vm447, %v443, 0.0
      %v450 = vsel %vm448, %v444, 0.0
      %451 = vst [vmem:[#allocation3] sm:$0xf] %v449
      %452 = vst [vmem:[#allocation3 + $0x8] sm:$0xf] %v450
      %v453 = vld [vmem:[#allocation2] sm:$0xf]
      %v454 = vld [vmem:[#allocation2 + $0x8] sm:$0xf]
      %v455 = vld [vmem:[#allocation2 + $0x10] sm:$0xf]
      %v459 = vrot.slane %v453, 4
      %v460 = vrot.slane %v454, 4
      %v461 = vrot.slane %v455, 4
      %462 = vrot.lane.b32.xlu0 %v459, 127
      %v463 = vpop.permute.xlu0 %462
      %464 = vrot.lane.b32.xlu0 %v460, 127
      %v465 = vpop.permute.xlu0 %464
      %466 = vrot.lane.b32.xlu0 %v461, 127
      %v467 = vpop.permute.xlu0 %466
      %vm468 = vcmask 1039360
      %v469 = vsel %vm468, %v463, %v465
      %v470 = vsel %vm468, %v465, %v467
      %473 = vst [vmem:[#allocation3] sm:$0xf0] %v469
      %474 = vst [vmem:[#allocation3 + $0x8] sm:$0xf0] %v470
      %v475 = vld [vmem:[#allocation2] sm:$0xf]
      %v476 = vld [vmem:[#allocation2 + $0x8] sm:$0xf]
      %v477 = vld [vmem:[#allocation2 + $0x10] sm:$0xf]
      %v478 = vsel %vm363, 1, 0
      %v479 = vsel %vm364, 1, 0
      %vm480 = vcmp.eq.s32.totalorder %v478, 1
      %vm481 = vcmp.eq.s32.totalorder %v479, 1
      %485 = vrot.lane.b32.xlu0 %v475, 126
      %v486 = vpop.permute.xlu0 %485
      %487 = vrot.lane.b32.xlu0 %v476, 126
      %v488 = vpop.permute.xlu0 %487
      %489 = vrot.lane.b32.xlu0 %v477, 126
      %v490 = vpop.permute.xlu0 %489
      %vm491 = vcmask 1031168
      %v492 = vsel %vm491, %v486, %v488
      %v493 = vsel %vm491, %v488, %v490
      %v496 = vsel %vm480, %v492, 0.0
      %v497 = vsel %vm481, %v493, 0.0
      %498 = vst [vmem:[#allocation3 + $0x10] sm:$0xf] %v496
      %499 = vst [vmem:[#allocation3 + $0x18] sm:$0xf] %v497
      %v500 = vld [vmem:[#allocation2] sm:$0xf]
      %v501 = vld [vmem:[#allocation2 + $0x8] sm:$0xf]
      %v502 = vld [vmem:[#allocation2 + $0x10] sm:$0xf]
      %506 = vrot.lane.b32.xlu0 %v500, 112
      %v507 = vpop.permute.xlu0 %506
      %508 = vrot.lane.b32.xlu0 %v501, 112
      %v509 = vpop.permute.xlu0 %508
      %510 = vrot.lane.b32.xlu0 %v502, 112
      %v511 = vpop.permute.xlu0 %510
      %vm512 = vcmask 916480
      %v513 = vsel %vm512, %v507, %v509
      %v514 = vsel %vm512, %v509, %v511
      %v517 = vsel %vm447, %v513, 0.0
      %v518 = vsel %vm448, %v514, 0.0
      %v521 = vrot.slane %v517, 4
      %v522 = vrot.slane %v518, 4
      %525 = vst [vmem:[#allocation3 + $0x10] sm:$0xf0] %v521
      %526 = vst [vmem:[#allocation3 + $0x18] sm:$0xf0] %v522
      %v527 = vld [vmem:[#allocation2] sm:$0xf]
      %v528 = vld [vmem:[#allocation2 + $0x8] sm:$0xf]
      %v529 = vld [vmem:[#allocation2 + $0x10] sm:$0xf]
      %533 = vrot.lane.b32.xlu0 %v527, 111
      %v534 = vpop.permute.xlu0 %533
      %535 = vrot.lane.b32.xlu0 %v528, 111
      %v536 = vpop.permute.xlu0 %535
      %537 = vrot.lane.b32.xlu0 %v529, 111
      %v538 = vpop.permute.xlu0 %537
      %vm539 = vcmask 908288
      %v540 = vsel %vm539, %v534, %v536
      %v541 = vsel %vm539, %v536, %v538
      %544 = vst [vmem:[#allocation3 + $0x20] sm:$0xf] %v540
      %545 = vst [vmem:[#allocation3 + $0x28] sm:$0xf] %v541
      %v546 = vld [vmem:[#allocation2] sm:$0xf]
      %v547 = vld [vmem:[#allocation2 + $0x8] sm:$0xf]
      %v548 = vld [vmem:[#allocation2 + $0x10] sm:$0xf]
      %552 = vrot.lane.b32.xlu0 %v546, 110
      %v553 = vpop.permute.xlu0 %552
      %554 = vrot.lane.b32.xlu0 %v547, 110
      %v555 = vpop.permute.xlu0 %554
      %556 = vrot.lane.b32.xlu0 %v548, 110
      %v557 = vpop.permute.xlu0 %556
      %vm558 = vcmask 900096
      %v559 = vsel %vm558, %v553, %v555
      %v560 = vsel %vm558, %v555, %v557
      %v563 = vsel %vm480, %v559, 0.0
      %v564 = vsel %vm481, %v560, 0.0
      %v567 = vrot.slane %v563, 4
      %v568 = vrot.slane %v564, 4
      %571 = vst [vmem:[#allocation3 + $0x20] sm:$0xf0] %v567
      %572 = vst [vmem:[#allocation3 + $0x28] sm:$0xf0] %v568
      %v573 = vld [vmem:[#allocation2] sm:$0xf]
      %v574 = vld [vmem:[#allocation2 + $0x8] sm:$0xf]
      %v575 = vld [vmem:[#allocation2 + $0x10] sm:$0xf]
      %579 = vrot.lane.b32.xlu0 %v573, 96
      %v580 = vpop.permute.xlu0 %579
      %581 = vrot.lane.b32.xlu0 %v574, 96
      %v582 = vpop.permute.xlu0 %581
      %583 = vrot.lane.b32.xlu0 %v575, 96
      %v584 = vpop.permute.xlu0 %583
      %vm585 = vcmask 785408
      %v586 = vsel %vm585, %v580, %v582
      %v587 = vsel %vm585, %v582, %v584
      %v590 = vsel %vm447, %v586, 0.0
      %v591 = vsel %vm448, %v587, 0.0
      %592 = vst [vmem:[#allocation3 + $0x30] sm:$0xf] %v590
      %593 = vst [vmem:[#allocation3 + $0x38] sm:$0xf] %v591
      %v594 = vld [vmem:[#allocation2] sm:$0xf]
      %v595 = vld [vmem:[#allocation2 + $0x8] sm:$0xf]
      %v596 = vld [vmem:[#allocation2 + $0x10] sm:$0xf]
      %v600 = vrot.slane %v594, 4
      %v601 = vrot.slane %v595, 4
      %v602 = vrot.slane %v596, 4
      %603 = vrot.lane.b32.xlu0 %v600, 95
      %v604 = vpop.permute.xlu0 %603
      %605 = vrot.lane.b32.xlu0 %v601, 95
      %v606 = vpop.permute.xlu0 %605
      %607 = vrot.lane.b32.xlu0 %v602, 95
      %v608 = vpop.permute.xlu0 %607
      %vm609 = vcmask 777216
      %v610 = vsel %vm609, %v604, %v606
      %v611 = vsel %vm609, %v606, %v608
      %614 = vst [vmem:[#allocation3 + $0x30] sm:$0xf0] %v610
      %615 = vst [vmem:[#allocation3 + $0x38] sm:$0xf0] %v611
      %v616 = vld [vmem:[#allocation2] sm:$0xf]
      %v617 = vld [vmem:[#allocation2 + $0x8] sm:$0xf]
      %v618 = vld [vmem:[#allocation2 + $0x10] sm:$0xf]
      %622 = vrot.lane.b32.xlu0 %v616, 94
      %v623 = vpop.permute.xlu0 %622
      %624 = vrot.lane.b32.xlu0 %v617, 94
      %v625 = vpop.permute.xlu0 %624
      %626 = vrot.lane.b32.xlu0 %v618, 94
      %v627 = vpop.permute.xlu0 %626
      %vm628 = vcmask 769024
      %v629 = vsel %vm628, %v623, %v625
      %v630 = vsel %vm628, %v625, %v627
      %v633 = vsel %vm480, %v629, 0.0
      %v634 = vsel %vm481, %v630, 0.0
      %635 = vst [vmem:[#allocation3 + $0x40] sm:$0xf] %v633
      %636 = vst [vmem:[#allocation3 + $0x48] sm:$0xf] %v634
      %v637 = vld [vmem:[#allocation3] sm:$0xff]
      %v638 = vld [vmem:[#allocation3 + $0x8] sm:$0xff]
      %v639 = vld [vmem:[#allocation3 + $0x10] sm:$0xff]
      %v640 = vld [vmem:[#allocation3 + $0x18] sm:$0xff]
      %v641 = vld [vmem:[#allocation3 + $0x20] sm:$0xff]
      %v642 = vld [vmem:[#allocation3 + $0x28] sm:$0xff]
      %v643 = vld [vmem:[#allocation3 + $0x30] sm:$0xff]
      %v644 = vld [vmem:[#allocation3 + $0x38] sm:$0xff]
      %v645 = vld [vmem:[#allocation3 + $0x40] sm:$0xf]
      %v646 = vld [vmem:[#allocation3 + $0x48] sm:$0xf]
      %v647 = vpack.c.bf16 %v639, %v637
      %v648 = vpack.c.bf16 %v640, %v638
      %v649 = vpack.c.bf16 %v643, %v641
      %v650 = vpack.c.bf16 %v644, %v642
      %v651 = vpack.c.bf16 %v645, %v645
      %v652 = vpack.c.bf16 %v646, %v646
      %v653 = vld [vmem:[%s3] sm:$0x1]
      %v654 = vld [vmem:[%s4] sm:$0x3]
      %656 = vset.pattern.permute.xlu0 0
      %657 = vperm.xlu0 %656, %v654
      %v658 = vpop.permute.xlu0 %657
      %vm660 = vcmask 293888
      %v662 = vsel %vm660, %v653, 0
      %v665 = vsel %vm392, %v651, 0
      %v668 = vsel %vm392, %v652, 0
      %670 = vmatpush.bf16.msra.mxu0 0
      %671 = vmatpush.bf16.msra.mxu0 0
      %672 = vmatpush.bf16.msra.mxu0 0
      %673 = vmatpush.bf16.msra.mxu0 0
      %674 = vmatpush.bf16.msra.mxu0 0
      %675 = vmatpush.bf16.msra.mxu0 %v665
      %676 = vmatpush.bf16.msra.mxu0 %v649
      %677 = vmatpush.bf16.msra.mxu0 %v647
      %678 = vmatmul.bf16.gmra.mxu0 %v662
      %v679 = vpop.f32.mrf.mxu0
      %v680 = vadd.f32 %v658, %v679
      %v681 = vpop.f32.mrf.mxu0
      %682 = vdwg.mxu0
      %683 = vmatpush.bf16.msra.mxu0 0
      %684 = vmatpush.bf16.msra.mxu0 0
      %685 = vmatpush.bf16.msra.mxu0 0
      %686 = vmatpush.bf16.msra.mxu0 0
      %687 = vmatpush.bf16.msra.mxu0 0
      %688 = vmatpush.bf16.msra.mxu0 %v668
      %689 = vmatpush.bf16.msra.mxu0 %v650
      %690 = vmatpush.bf16.msra.mxu0 %v648
      %691 = vmatmul.bf16.gmra.mxu0 %v662
      %v692 = vpop.f32.mrf.mxu0
      %v693 = vadd.f32 %v658, %v692
      %v694 = vpop.f32.mrf.mxu0
      %695 = vdwg.mxu0
      %v696 = vmax.f32 %v680, 0.0
      %v697 = vmax.f32 %v693, 0.0
      %v698 = vpack.c.bf16 %v697, %v696
      %v700 = vrot.slane %v698, 6
      %702 = vst [vmem:[%s332] sm:$0x44] %v700
      %v703 = vld [vmem:[%s332] sm:$0x77]
      %v704 = vld [vmem:[%s5] sm:$0x7]
      %v705 = vld [vmem:[%s6] sm:$0x3f]
      %707 = vset.pattern.permute.xlu0 0
      %708 = vperm.xlu0 %707, %v705
      %v709 = vpop.permute.xlu0 %708
      %v712 = vunpack.c.l.b16 %v703
      %v713 = vunpack.c.h.b16 %v703
      %v714 = vpack.c.b16 %v712, %v712
      %v715 = vpack.c.b16 %v713, %v713
      %vm716 = vcmask 48128
      %v718 = vsel %vm716, %v704, 0
      %vm720 = vcmask 1042432
      %v722 = vsel %vm720, %v714, 0
      %v725 = vsel %vm720, %v715, 0
      %727 = vmatpush.bf16.msra.mxu0 0
      %728 = vmatpush.bf16.msra.mxu0 0
      %729 = vmatpush.bf16.msra.mxu0 0
      %730 = vmatpush.bf16.msra.mxu0 0
      %731 = vmatpush.bf16.msra.mxu0 0
      %732 = vmatpush.bf16.msra.mxu0 0
      %733 = vmatpush.bf16.msra.mxu0 0
      %734 = vmatpush.bf16.msra.mxu0 %v722
      %735 = vmatmul.bf16.gmra.mxu0 %v718
      %v736 = vpop.f32.mrf.mxu0
      %v737 = vadd.f32 %v709, %v736
      %v738 = vpop.f32.mrf.mxu0
      %739 = vdwg.mxu0
      %740 = vmatpush.bf16.msra.mxu0 0
      %741 = vmatpush.bf16.msra.mxu0 0
      %742 = vmatpush.bf16.msra.mxu0 0
      %743 = vmatpush.bf16.msra.mxu0 0
      %744 = vmatpush.bf16.msra.mxu0 0
      %745 = vmatpush.bf16.msra.mxu0 0
      %746 = vmatpush.bf16.msra.mxu0 0
      %747 = vmatpush.bf16.msra.mxu0 %v725
      %748 = vmatmul.bf16.gmra.mxu0 %v718
      %v749 = vpop.f32.mrf.mxu0
      %v750 = vadd.f32 %v709, %v749
      %v751 = vpop.f32.mrf.mxu0
      %752 = vdwg.mxu0
      %v753 = vmax.f32 %v737, 0.0
      %v754 = vmax.f32 %v750, 0.0
      %757 = vrot.lane.b32.xlu0 %v753, 17
      %v758 = vpop.permute.xlu0 %757
      %759 = vrot.lane.b32.xlu0 %v754, 17
      %v760 = vpop.permute.xlu0 %759
      %v761 = vsel %vm433, %v758, %v760
      %vm765 = vcmask 1045640
      %766 = vst.msk [vmem:[#allocation2] sm:$0x3f] %vm765, %v758
      %767 = vst [vmem:[#allocation2 + $0x8] sm:$0x3f] %v761
      %vm768 = vcmask 136192
      %769 = vst.msk [vmem:[#allocation2 + $0x10] sm:$0x3f] %vm768, %v760
      %v770 = vld [vmem:[#allocation2] sm:$0x3f]
      %v771 = vld [vmem:[#allocation2 + $0x8] sm:$0x3f]
      %v772 = vsel %vm447, %v770, 0.0
      %v773 = vsel %vm448, %v771, 0.0
      %774 = vst [vmem:[#allocation3] sm:$0x3f] %v772
      %775 = vst [vmem:[#allocation3 + $0x8] sm:$0x3f] %v773
      %v776 = vld [vmem:[#allocation2] sm:$0x3f]
      %v777 = vld [vmem:[#allocation2 + $0x8] sm:$0x3f]
      %v778 = vld [vmem:[#allocation2 + $0x10] sm:$0x3f]
      %v782 = vrot.slane %v776, 2
      %v783 = vrot.slane %v777, 2
      %v784 = vrot.slane %v778, 2
      %785 = vrot.lane.b32.xlu0 %v782, 127
      %v786 = vpop.permute.xlu0 %785
      %787 = vrot.lane.b32.xlu0 %v783, 127
      %v788 = vpop.permute.xlu0 %787
      %789 = vrot.lane.b32.xlu0 %v784, 127
      %v790 = vpop.permute.xlu0 %789
      %v791 = vsel %vm468, %v786, %v788
      %v792 = vsel %vm468, %v788, %v790
      %795 = vst [vmem:[#allocation3] sm:$0xc0] %v791
      %796 = vst [vmem:[#allocation3 + $0x8] sm:$0xc0] %v792
      %797 = vst [vmem:[#allocation3 + $0x10] sm:$0xf] %v791
      %798 = vst [vmem:[#allocation3 + $0x18] sm:$0xf] %v792
      %v799 = vld [vmem:[#allocation2] sm:$0x3f]
      %v800 = vld [vmem:[#allocation2 + $0x8] sm:$0x3f]
      %v801 = vld [vmem:[#allocation2 + $0x10] sm:$0x3f]
      %805 = vrot.lane.b32.xlu0 %v799, 126
      %v806 = vpop.permute.xlu0 %805
      %807 = vrot.lane.b32.xlu0 %v800, 126
      %v808 = vpop.permute.xlu0 %807
      %809 = vrot.lane.b32.xlu0 %v801, 126
      %v810 = vpop.permute.xlu0 %809
      %v811 = vsel %vm491, %v806, %v808
      %v812 = vsel %vm491, %v808, %v810
      %v815 = vsel %vm480, %v811, 0.0
      %v816 = vsel %vm481, %v812, 0.0
      %v819 = vrot.slane %v815, 4
      %v820 = vrot.slane %v816, 4
      %823 = vst [vmem:[#allocation3 + $0x10] sm:$0xf0] %v819
      %824 = vst [vmem:[#allocation3 + $0x18] sm:$0xf0] %v820
      %825 = vst [vmem:[#allocation3 + $0x20] sm:$0x3] %v819
      %826 = vst [vmem:[#allocation3 + $0x28] sm:$0x3] %v820
      %v827 = vld [vmem:[#allocation2] sm:$0x3f]
      %v828 = vld [vmem:[#allocation2 + $0x8] sm:$0x3f]
      %v829 = vld [vmem:[#allocation2 + $0x10] sm:$0x3f]
      %833 = vrot.lane.b32.xlu0 %v827, 112
      %v834 = vpop.permute.xlu0 %833
      %835 = vrot.lane.b32.xlu0 %v828, 112
      %v836 = vpop.permute.xlu0 %835
      %837 = vrot.lane.b32.xlu0 %v829, 112
      %v838 = vpop.permute.xlu0 %837
      %v839 = vsel %vm512, %v834, %v836
      %v840 = vsel %vm512, %v836, %v838
      %v843 = vsel %vm447, %v839, 0.0
      %v844 = vsel %vm448, %v840, 0.0
      %v847 = vrot.slane %v843, 6
      %v848 = vrot.slane %v844, 6
      %851 = vst [vmem:[#allocation3 + $0x20] sm:$0xfc] %v847
      %852 = vst [vmem:[#allocation3 + $0x28] sm:$0xfc] %v848
      %v853 = vld [vmem:[#allocation2] sm:$0x3f]
      %v854 = vld [vmem:[#allocation2 + $0x8] sm:$0x3f]
      %v855 = vld [vmem:[#allocation2 + $0x10] sm:$0x3f]
      %859 = vrot.lane.b32.xlu0 %v853, 111
      %v860 = vpop.permute.xlu0 %859
      %861 = vrot.lane.b32.xlu0 %v854, 111
      %v862 = vpop.permute.xlu0 %861
      %863 = vrot.lane.b32.xlu0 %v855, 111
      %v864 = vpop.permute.xlu0 %863
      %v865 = vsel %vm539, %v860, %v862
      %v866 = vsel %vm539, %v862, %v864
      %869 = vst [vmem:[#allocation3 + $0x30] sm:$0x3f] %v865
      %870 = vst [vmem:[#allocation3 + $0x38] sm:$0x3f] %v866
      %v871 = vld [vmem:[#allocation2] sm:$0x3f]
      %v872 = vld [vmem:[#allocation2 + $0x8] sm:$0x3f]
      %v873 = vld [vmem:[#allocation2 + $0x10] sm:$0x3f]
      %877 = vrot.lane.b32.xlu0 %v871, 110
      %v878 = vpop.permute.xlu0 %877
      %879 = vrot.lane.b32.xlu0 %v872, 110
      %v880 = vpop.permute.xlu0 %879
      %881 = vrot.lane.b32.xlu0 %v873, 110
      %v882 = vpop.permute.xlu0 %881
      %v883 = vsel %vm558, %v878, %v880
      %v884 = vsel %vm558, %v880, %v882
      %v887 = vsel %vm480, %v883, 0.0
      %v888 = vsel %vm481, %v884, 0.0
      %v891 = vrot.slane %v887, 2
      %v892 = vrot.slane %v888, 2
      %895 = vst [vmem:[#allocation3 + $0x30] sm:$0xc0] %v891
      %896 = vst [vmem:[#allocation3 + $0x38] sm:$0xc0] %v892
      %897 = vst [vmem:[#allocation3 + $0x40] sm:$0xf] %v891
      %898 = vst [vmem:[#allocation3 + $0x48] sm:$0xf] %v892
      %v899 = vld [vmem:[#allocation2] sm:$0x3f]
      %v900 = vld [vmem:[#allocation2 + $0x8] sm:$0x3f]
      %v901 = vld [vmem:[#allocation2 + $0x10] sm:$0x3f]
      %905 = vrot.lane.b32.xlu0 %v899, 96
      %v906 = vpop.permute.xlu0 %905
      %907 = vrot.lane.b32.xlu0 %v900, 96
      %v908 = vpop.permute.xlu0 %907
      %909 = vrot.lane.b32.xlu0 %v901, 96
      %v910 = vpop.permute.xlu0 %909
      %v911 = vsel %vm585, %v906, %v908
      %v912 = vsel %vm585, %v908, %v910
      %v915 = vsel %vm447, %v911, 0.0
      %v916 = vsel %vm448, %v912, 0.0
      %v919 = vrot.slane %v915, 4
      %v920 = vrot.slane %v916, 4
      %923 = vst [vmem:[#allocation3 + $0x40] sm:$0xf0] %v919
      %924 = vst [vmem:[#allocation3 + $0x48] sm:$0xf0] %v920
      %925 = vst [vmem:[#allocation3 + $0x50] sm:$0x3] %v919
      %926 = vst [vmem:[#allocation3 + $0x58] sm:$0x3] %v920
      %v927 = vld [vmem:[#allocation2] sm:$0x3f]
      %v928 = vld [vmem:[#allocation2 + $0x8] sm:$0x3f]
      %v929 = vld [vmem:[#allocation2 + $0x10] sm:$0x3f]
      %v933 = vrot.slane %v927, 6
      %v934 = vrot.slane %v928, 6
      %v935 = vrot.slane %v929, 6
      %936 = vrot.lane.b32.xlu0 %v933, 95
      %v937 = vpop.permute.xlu0 %936
      %938 = vrot.lane.b32.xlu0 %v934, 95
      %v939 = vpop.permute.xlu0 %938
      %940 = vrot.lane.b32.xlu0 %v935, 95
      %v941 = vpop.permute.xlu0 %940
      %v942 = vsel %vm609, %v937, %v939
      %v943 = vsel %vm609, %v939, %v941
      %946 = vst [vmem:[#allocation3 + $0x50] sm:$0xfc] %v942
      %947 = vst [vmem:[#allocation3 + $0x58] sm:$0xfc] %v943
      %v948 = vld [vmem:[#allocation2] sm:$0x3f]
      %v949 = vld [vmem:[#allocation2 + $0x8] sm:$0x3f]
      %v950 = vld [vmem:[#allocation2 + $0x10] sm:$0x3f]
      %954 = vrot.lane.b32.xlu0 %v948, 94
      %v955 = vpop.permute.xlu0 %954
      %956 = vrot.lane.b32.xlu0 %v949, 94
      %v957 = vpop.permute.xlu0 %956
      %958 = vrot.lane.b32.xlu0 %v950, 94
      %v959 = vpop.permute.xlu0 %958
      %v960 = vsel %vm628, %v955, %v957
      %v961 = vsel %vm628, %v957, %v959
      %v964 = vsel %vm480, %v960, 0.0
      %v965 = vsel %vm481, %v961, 0.0
      %966 = vst [vmem:[#allocation3 + $0x60] sm:$0x3f] %v964
      %967 = vst [vmem:[#allocation3 + $0x68] sm:$0x3f] %v965
      %v968 = vld [vmem:[#allocation3] sm:$0xff]
      %v969 = vld [vmem:[#allocation3 + $0x8] sm:$0xff]
      %v970 = vld [vmem:[#allocation3 + $0x10] sm:$0xff]
      %v971 = vld [vmem:[#allocation3 + $0x18] sm:$0xff]
      %v972 = vld [vmem:[#allocation3 + $0x20] sm:$0xff]
      %v973 = vld [vmem:[#allocation3 + $0x28] sm:$0xff]
      %v974 = vld [vmem:[#allocation3 + $0x30] sm:$0xff]
      %v975 = vld [vmem:[#allocation3 + $0x38] sm:$0xff]
      %v976 = vld [vmem:[#allocation3 + $0x40] sm:$0xff]
      %v977 = vld [vmem:[#allocation3 + $0x48] sm:$0xff]
      %v978 = vld [vmem:[#allocation3 + $0x50] sm:$0xff]
      %v979 = vld [vmem:[#allocation3 + $0x58] sm:$0xff]
      %v980 = vld [vmem:[#allocation3 + $0x60] sm:$0x3f]
      %v981 = vld [vmem:[#allocation3 + $0x68] sm:$0x3f]
      %v982 = vpack.c.bf16 %v970, %v968
      %v983 = vpack.c.bf16 %v971, %v969
      %v984 = vpack.c.bf16 %v974, %v972
      %v985 = vpack.c.bf16 %v975, %v973
      %v986 = vpack.c.bf16 %v978, %v976
      %v987 = vpack.c.bf16 %v979, %v977
      %v988 = vpack.c.bf16 %v980, %v980
      %v989 = vpack.c.bf16 %v981, %v981
      %v990 = vld [vmem:[%s7] sm:$0x1]
      %v991 = vld [vmem:[%s8] sm:$0x3]
      %993 = vset.pattern.permute.xlu0 0
      %994 = vperm.xlu0 %993, %v991
      %v995 = vpop.permute.xlu0 %994
      %vm997 = vcmask 441344
      %v999 = vsel %vm997, %v990, 0
      %v1002 = vsel %vm720, %v988, 0
      %v1005 = vsel %vm720, %v989, 0
      %1007 = vmatpush.bf16.msra.mxu0 0
      %1008 = vmatpush.bf16.msra.mxu0 0
      %1009 = vmatpush.bf16.msra.mxu0 0
      %1010 = vmatpush.bf16.msra.mxu0 0
      %1011 = vmatpush.bf16.msra.mxu0 %v1002
      %1012 = vmatpush.bf16.msra.mxu0 %v986
      %1013 = vmatpush.bf16.msra.mxu0 %v984
      %1014 = vmatpush.bf16.msra.mxu0 %v982
      %1015 = vmatmul.bf16.gmra.mxu0 %v999
      %v1016 = vpop.f32.mrf.mxu0
      %v1017 = vadd.f32 %v995, %v1016
      %v1018 = vpop.f32.mrf.mxu0
      %1019 = vdwg.mxu0
      %1020 = vmatpush.bf16.msra.mxu0 0
      %1021 = vmatpush.bf16.msra.mxu0 0
      %1022 = vmatpush.bf16.msra.mxu0 0
      %1023 = vmatpush.bf16.msra.mxu0 0
      %1024 = vmatpush.bf16.msra.mxu0 %v1005
      %1025 = vmatpush.bf16.msra.mxu0 %v987
      %1026 = vmatpush.bf16.msra.mxu0 %v985
      %1027 = vmatpush.bf16.msra.mxu0 %v983
      %1028 = vmatmul.bf16.gmra.mxu0 %v999
      %v1029 = vpop.f32.mrf.mxu0
      %v1030 = vadd.f32 %v995, %v1029
      %v1031 = vpop.f32.mrf.mxu0
      %1032 = vdwg.mxu0
      %v1033 = vmax.f32 %v1017, 0.0
      %v1034 = vmax.f32 %v1030, 0.0
      %v1035 = vpack.c.bf16 %v1034, %v1033
      %v1037 = vrot.slane %v1035, 5
      %1039 = vst [vmem:[%s332] sm:$0x88] %v1037
      %p1040 = scmp.lt.s32.totalorder %s20, 1
      %s1041 = scalar_select %p1040, %s20, 1
      %s1042 = smul.addr %s1041, 2
      %s1043 = smul.addr %s1042, 4
      %s1044 = scalar_lea.vmem %s9, %s1043
      // Predicated region
      $region57: #{_lambda_.1} parent=55 // pred_check
        %p1045 = pneg %p232
      $region58: #{_lambda_.1} parent=55 // pred_check_branch
        %1047 = sbr.rel (%p1045) target = $region60
      $region59: #{_lambda_.1} parent=55 // pred_region
        _
      $region60: #{_lambda_.1} parent=55 // pred_fallthru
        _
    $region56: #{_lambda_.1} parent=5 // pred_fallthru
      _
    %p1048 = scmp.le.s32.totalorder 2, %s15
    // Predicated region
    $region61: #{_lambda_.1} parent=5 // pred_check
      %p1049 = pneg %p1048
    $region62: #{_lambda_.1} parent=5 // pred_check_branch
      %1051 = sbr.rel (%p1049) target = $region64
    $region63: #{_lambda_.1} parent=5 // pred_region
      %s1052 = ssub.s32 %s15, 2
      // Predicated region
      $region65: #{_lambda_.1} parent=63 // pred_check
        %p1053 = pneg %p238
      $region66: #{_lambda_.1} parent=63 // pred_check_branch
        %1055 = sbr.rel (%p1053) target = $region68
      $region67: #{_lambda_.1} parent=63 // pred_region
        %p1056 = scmp.lt.s32.totalorder %s21, 1
        %s1057 = scalar_select %p1056, %s21, 1
        %s1058 = smul.addr %s1057, 2
        %s1059 = smul.addr %s1058, 4
        %s1060 = scalar_lea.vmem %s9, %s1059
      $region68: #{_lambda_.1} parent=63 // pred_fallthru
        _
    $region64: #{_lambda_.1} parent=5 // pred_fallthru
      _
  $region6: #{_lambda_.1} parent=0 // loop_footer
    %s19 = sadd.s32 1, %s15
  $region7: #{_lambda_.1} parent=0 // loop_footer_branch
    %14 = sbr.rel target = $region3
  $region8: #{_lambda_.1} parent=0 // loop_exit
    _

</llo_original>
